<compile_context>
chip_gen: v5e
topology: v5e:2x2
jax: 0.10.0
libtpu: 0.0.40
codegen_flags: <defaults>
</compile_context>

<pallas_src>
import jax
import jax.numpy as jnp
from jax.experimental import pallas as pl
from jax.experimental.pallas import tpu as pltpu


def lstm_kernel(x_ref, wih_ref, b_ref, whh_ref, wo_ref, bo_ref, out_ref):
    """Fused LSTM unroll (static T) + linear head, duplicated-gate layout.

    x_ref   : (B, T, 1)   raw batch-first input (as handed to the model)
    wih_ref : (1, 8H)     input->gate weights, column blocks [i i f f o o g g]
    b_ref   : (1, 8H)     combined bias b_ih + b_hh, same column layout
    whh_ref : (2H, 8H)    hidden->gate weights, rows [H:2H] are zero
    wo_ref  : (1, 2H)     linear head weights [w_lin | 0]
    bo_ref  : (1, 1)      linear head bias
    out_ref : (B, 1)      output
    """
    B, T, _ = x_ref.shape
    G = wih_ref.shape[1]            # 8H (duplicated gate width)
    H2 = whh_ref.shape[0]           # 2H
    H = H2 // 2

    # --- Loop-invariant loads / broadcasts hoisted out of the recurrence. ---
    x = x_ref[...].astype(jnp.float32)                  # (B, T, 1) — tiny
    whh = whh_ref[...]                                  # (2H, 8H), loaded once
    wih_b = jnp.broadcast_to(wih_ref[...], (B, G))      # hoisted (no per-step
    bias_b = jnp.broadcast_to(b_ref[...], (B, G))       #  broadcast_in_dim)
    # TODO(synk): drive the MXU explicitly (pltpu.matmul_push_rhs once +
    # matmul_acc_lhs/matmul_pop per step) so whh is staged a single time.

    # h / c carried *duplicated* across both 64-lane halves ([v | v]) so every
    # elementwise product below is a same-lane, whole-vreg VPU op.
    h = jnp.zeros((B, H2), jnp.float32)
    c = jnp.zeros((B, H2), jnp.float32)

    # --- Recurrence: fully unrolled, one (B,2H)@(2H,8H) matmul per step. ---
    for t in range(T):
        # Input projection for step t: independent of h, overlaps the matmul.
        x_t = x[:, t, :]                                 # (B, 1), static slice
        pre = x_t * wih_b + bias_b + jnp.dot(
            h, whh, preferred_element_type=jnp.float32)  # (B, 8H)

        # Homogeneous, 128-lane-aligned activation regions (no masked EUP,
        # no lane-mask blends).
        sig = jax.nn.sigmoid(pre[:, : 6 * H])            # [i i | f f | o o]
        g_d = jnp.tanh(pre[:, 6 * H:])                   # [g g]
        i_d = sig[:, : 2 * H]
        f_d = sig[:, 2 * H: 4 * H]
        o_d = sig[:, 4 * H:]

        c = f_d * c + i_d * g_d                          # all duplicated/aligned
        h = o_d * jnp.tanh(c)

    # --- Linear head (output_size == 1): VPU multiply + lane reduction. ---
    # TODO(synk): if output_size ever grows, make the out layout lane-dense.
    out_ref[...] = (jnp.sum(h * wo_ref[...], axis=-1, keepdims=True)
                    + bo_ref[...]).astype(out_ref.dtype)


def prepare_lstm_params(w_ih, w_hh, b_ih, b_hh, w_lin, b_lin):
    """One-time (parameter-load-time) repack of PyTorch-layout LSTM weights.

    Gates are reordered [i, f, g, o] -> [i, f, o, g] and each gate's 64
    columns are duplicated so every gate occupies a full 128-lane vreg in the
    kernel.  W_hh rows [H:2H] are zero so the duplicated hidden state
    contributes exactly once.  This runs once, off the per-call hot path.
    """
    H = w_hh.shape[1]
    I = w_ih.shape[1]
    assert I == 1, "kernel specialized to input_size=1"
    order = (0, 1, 3, 2)                       # [i, f, g, o] -> [i, f, o, g]

    wih_g = w_ih.reshape(4, H, I)[..., 0]      # (4, H)
    whh_g = w_hh.reshape(4, H, H)              # (4, H_out, H_in)
    b_g = (b_ih + b_hh).reshape(4, H)          # (4, H)

    def dup(v):                                # duplicate along last axis
        return jnp.concatenate([v, v], axis=-1)

    wih_vec = jnp.concatenate([dup(wih_g[k]) for k in order])           # (8H,)
    b_vec = jnp.concatenate([dup(b_g[k]) for k in order])               # (8H,)

    whh_t = jnp.transpose(whh_g, (0, 2, 1))                             # (4, H_in, H_out)
    whh_cols = jnp.concatenate([dup(whh_t[k]) for k in order], axis=-1)  # (H, 8H)
    whh_big = jnp.concatenate([whh_cols, jnp.zeros_like(whh_cols)], axis=0)  # (2H, 8H)

    w_out = jnp.concatenate(
        [w_lin.reshape(1, H), jnp.zeros((1, H), w_lin.dtype)], axis=1)  # (1, 2H)
    b_out = b_lin.reshape(1, 1)                                          # (1, 1)

    return (wih_vec.reshape(1, 8 * H).astype(jnp.float32),
            b_vec.reshape(1, 8 * H).astype(jnp.float32),
            whh_big.astype(jnp.float32),
            w_out.astype(jnp.float32),
            b_out.astype(jnp.float32))


def lstm_model_forward(x, packed_params):
    """x: (B, T, 1) batch-first, like PyTorch. Returns (B, 1)."""
    wih_vec, b_vec, whh_big, w_out, b_out = packed_params
    B, T, I = x.shape
    assert I == 1, "kernel specialized to input_size=1"

    # TODO(synk): at realistic batch sizes add a leading batch grid with
    # dimension_semantics=("parallel",) (TILE_B=128 on v5e, 256 on v6e/v7x) so
    # v7x uses both TensorCores; at B=2 a grid would only add per-step overhead.
    return pl.pallas_call(
        lstm_kernel,
        out_shape=jax.ShapeDtypeStruct((B, 1), jnp.float32),
        in_specs=[pl.BlockSpec(memory_space=pltpu.MemorySpace.VMEM)] * 6,
        out_specs=pl.BlockSpec(memory_space=pltpu.MemorySpace.VMEM),
    )(x.astype(jnp.float32), wih_vec, b_vec, whh_big, w_out, b_out)


def lstm_model_reference(x, w_ih, w_hh, b_ih, b_hh, w_lin, b_lin):
    """Pure-JAX reference matching torch.nn.LSTM + Linear semantics."""
    B, T, I = x.shape
    H = w_hh.shape[1]
    wih = jnp.transpose(w_ih.reshape(4, H, I), (0, 2, 1))
    whh = jnp.transpose(w_hh.reshape(4, H, H), (0, 2, 1))
    b = (b_ih + b_hh).reshape(4, 1, H)
    h = jnp.zeros((B, H), jnp.float32)
    c = jnp.zeros((B, H), jnp.float32)
    for t in range(T):
        xt = x[:, t, :]
        i_g = jax.nn.sigmoid(xt @ wih[0] + h @ whh[0] + b[0])
        f_g = jax.nn.sigmoid(xt @ wih[1] + h @ whh[1] + b[1])
        g_g = jnp.tanh(xt @ wih[2] + h @ whh[2] + b[2])
        o_g = jax.nn.sigmoid(xt @ wih[3] + h @ whh[3] + b[3])
        c = f_g * c + i_g * g_g
        h = o_g * jnp.tanh(c)
    return h @ w_lin.T + b_lin[None, :]


if __name__ == "__main__":
    B, T, I, H, O = 2, 8, 1, 64, 1

    key = jax.random.PRNGKey(0)
    kx, k1, k2, k3, k4, k5, k6 = jax.random.split(key, 7)

    # Deterministic PyTorch-style uniform(-1/sqrt(H), 1/sqrt(H)) init.
    s = 1.0 / jnp.sqrt(jnp.float32(H))
    w_ih = jax.random.uniform(k1, (4 * H, I), jnp.float32, -s, s)
    w_hh = jax.random.uniform(k2, (4 * H, H), jnp.float32, -s, s)
    b_ih = jax.random.uniform(k3, (4 * H,), jnp.float32, -s, s)
    b_hh = jax.random.uniform(k4, (4 * H,), jnp.float32, -s, s)
    w_lin = jax.random.uniform(k5, (O, H), jnp.float32, -s, s)
    b_lin = jax.random.uniform(k6, (O,), jnp.float32, -s, s)

    x = jax.random.normal(kx, (B, T, I), jnp.float32)

    # One-time weight repack (parameter-load time, outside the per-call path).
    packed = prepare_lstm_params(w_ih, w_hh, b_ih, b_hh, w_lin, b_lin)
    packed = jax.tree_util.tree_map(jax.block_until_ready, packed)

    forward = jax.jit(lstm_model_forward)
    out = jax.block_until_ready(forward(x, packed))

    ref = lstm_model_reference(x, w_ih, w_hh, b_ih, b_hh, w_lin, b_lin)
    assert out.shape == (B, O), out.shape
    assert jnp.allclose(out, ref, atol=1e-5, rtol=1e-5), (out, ref)

    print("KERNEL_OK")
</pallas_src>

<mosaic_0001>
module attributes {stable_mosaic.version = 11 : i64} {
  func.func @lstm_kernel(%arg0: memref<2x8x1xf32, #tpu.memory_space<vmem>>, %arg1: memref<1x512xf32, #tpu.memory_space<vmem>>, %arg2: memref<1x512xf32, #tpu.memory_space<vmem>>, %arg3: memref<128x512xf32, #tpu.memory_space<vmem>>, %arg4: memref<1x128xf32, #tpu.memory_space<vmem>>, %arg5: memref<1x1xf32, #tpu.memory_space<vmem>>, %arg6: memref<2x1xf32, #tpu.memory_space<vmem>>) attributes {dimension_semantics = [], scalar_prefetch = 0 : i64, scratch_operands = 0 : i64, tpu.core_type = #tpu.core_type<tc>} {
    %c0 = arith.constant 0 : index
    %c0_0 = arith.constant 0 : index
    %c0_1 = arith.constant 0 : index
    %0 = vector.load %arg0[%c0, %c0_0, %c0_1] : memref<2x8x1xf32, #tpu.memory_space<vmem>>, vector<2x8x1xf32>
    %c0_2 = arith.constant 0 : index
    %c0_3 = arith.constant 0 : index
    %1 = vector.load %arg3[%c0_2, %c0_3] : memref<128x512xf32, #tpu.memory_space<vmem>>, vector<128x512xf32>
    %c0_4 = arith.constant 0 : index
    %c0_5 = arith.constant 0 : index
    %2 = vector.load %arg1[%c0_4, %c0_5] : memref<1x512xf32, #tpu.memory_space<vmem>>, vector<1x512xf32>
    %3 = vector.shape_cast %2 : vector<1x512xf32> to vector<1x512xf32>
    %4 = vector.broadcast %3 : vector<1x512xf32> to vector<2x512xf32>
    %c0_6 = arith.constant 0 : index
    %c0_7 = arith.constant 0 : index
    %5 = vector.load %arg2[%c0_6, %c0_7] : memref<1x512xf32, #tpu.memory_space<vmem>>, vector<1x512xf32>
    %6 = vector.shape_cast %5 : vector<1x512xf32> to vector<1x512xf32>
    %7 = vector.broadcast %6 : vector<1x512xf32> to vector<2x512xf32>
    %cst = arith.constant 0.000000e+00 : f32
    %8 = vector.broadcast %cst : f32 to vector<2x128xf32>
    %cst_8 = arith.constant 0.000000e+00 : f32
    %9 = vector.broadcast %cst_8 : f32 to vector<2x128xf32>
    %10 = vector.extract_strided_slice %0 {offsets = [0, 0, 0], sizes = [2, 1, 1], strides = [1, 1, 1]} : vector<2x8x1xf32> to vector<2x1x1xf32>
    %11 = vector.shape_cast %10 : vector<2x1x1xf32> to vector<2x1xf32>
    %12 = vector.broadcast %11 : vector<2x1xf32> to vector<2x512xf32>
    %13 = arith.mulf %12, %4 : vector<2x512xf32>
    %14 = arith.addf %13, %7 : vector<2x512xf32>
    %cst_9 = arith.constant dense<0.000000e+00> : vector<2x512xf32>
    %15 = tpu.matmul %8, %1, %cst_9 {dimension_numbers = #tpu.dot_dimension_numbers<[1], [0], [0], [1], [0, 0, 1, 1], [], []>} : vector<2x128xf32>, vector<128x512xf32>, vector<2x512xf32> -> vector<2x512xf32>
    %16 = arith.addf %14, %15 : vector<2x512xf32>
    %17 = vector.extract_strided_slice %16 {offsets = [0, 0], sizes = [2, 384], strides = [1, 1]} : vector<2x512xf32> to vector<2x384xf32>
    %18 = arith.negf %17 : vector<2x384xf32>
    %19 = math.exp %18 : vector<2x384xf32>
    %cst_10 = arith.constant 1.000000e+00 : f32
    %20 = vector.broadcast %cst_10 : f32 to vector<2x384xf32>
    %21 = arith.addf %20, %19 : vector<2x384xf32>
    %22 = arith.divf %20, %21 : vector<2x384xf32>
    %23 = vector.extract_strided_slice %16 {offsets = [0, 384], sizes = [2, 128], strides = [1, 1]} : vector<2x512xf32> to vector<2x128xf32>
    %24 = math.tanh %23 : vector<2x128xf32>
    %25 = vector.extract_strided_slice %22 {offsets = [0, 0], sizes = [2, 128], strides = [1, 1]} : vector<2x384xf32> to vector<2x128xf32>
    %26 = vector.extract_strided_slice %22 {offsets = [0, 128], sizes = [2, 128], strides = [1, 1]} : vector<2x384xf32> to vector<2x128xf32>
    %27 = vector.extract_strided_slice %22 {offsets = [0, 256], sizes = [2, 128], strides = [1, 1]} : vector<2x384xf32> to vector<2x128xf32>
    %28 = arith.mulf %26, %9 : vector<2x128xf32>
    %29 = arith.mulf %25, %24 : vector<2x128xf32>
    %30 = arith.addf %28, %29 : vector<2x128xf32>
    %31 = math.tanh %30 : vector<2x128xf32>
    %32 = arith.mulf %27, %31 : vector<2x128xf32>
    %33 = vector.extract_strided_slice %0 {offsets = [0, 1, 0], sizes = [2, 1, 1], strides = [1, 1, 1]} : vector<2x8x1xf32> to vector<2x1x1xf32>
    %34 = vector.shape_cast %33 : vector<2x1x1xf32> to vector<2x1xf32>
    %35 = vector.broadcast %34 : vector<2x1xf32> to vector<2x512xf32>
    %36 = arith.mulf %35, %4 : vector<2x512xf32>
    %37 = arith.addf %36, %7 : vector<2x512xf32>
    %cst_11 = arith.constant dense<0.000000e+00> : vector<2x512xf32>
    %38 = tpu.matmul %32, %1, %cst_11 {dimension_numbers = #tpu.dot_dimension_numbers<[1], [0], [0], [1], [0, 0, 1, 1], [], []>} : vector<2x128xf32>, vector<128x512xf32>, vector<2x512xf32> -> vector<2x512xf32>
    %39 = arith.addf %37, %38 : vector<2x512xf32>
    %40 = vector.extract_strided_slice %39 {offsets = [0, 0], sizes = [2, 384], strides = [1, 1]} : vector<2x512xf32> to vector<2x384xf32>
    %41 = arith.negf %40 : vector<2x384xf32>
    %42 = math.exp %41 : vector<2x384xf32>
    %cst_12 = arith.constant 1.000000e+00 : f32
    %43 = vector.broadcast %cst_12 : f32 to vector<2x384xf32>
    %44 = arith.addf %43, %42 : vector<2x384xf32>
    %45 = arith.divf %43, %44 : vector<2x384xf32>
    %46 = vector.extract_strided_slice %39 {offsets = [0, 384], sizes = [2, 128], strides = [1, 1]} : vector<2x512xf32> to vector<2x128xf32>
    %47 = math.tanh %46 : vector<2x128xf32>
    %48 = vector.extract_strided_slice %45 {offsets = [0, 0], sizes = [2, 128], strides = [1, 1]} : vector<2x384xf32> to vector<2x128xf32>
    %49 = vector.extract_strided_slice %45 {offsets = [0, 128], sizes = [2, 128], strides = [1, 1]} : vector<2x384xf32> to vector<2x128xf32>
    %50 = vector.extract_strided_slice %45 {offsets = [0, 256], sizes = [2, 128], strides = [1, 1]} : vector<2x384xf32> to vector<2x128xf32>
    %51 = arith.mulf %49, %30 : vector<2x128xf32>
    %52 = arith.mulf %48, %47 : vector<2x128xf32>
    %53 = arith.addf %51, %52 : vector<2x128xf32>
    %54 = math.tanh %53 : vector<2x128xf32>
    %55 = arith.mulf %50, %54 : vector<2x128xf32>
    %56 = vector.extract_strided_slice %0 {offsets = [0, 2, 0], sizes = [2, 1, 1], strides = [1, 1, 1]} : vector<2x8x1xf32> to vector<2x1x1xf32>
    %57 = vector.shape_cast %56 : vector<2x1x1xf32> to vector<2x1xf32>
    %58 = vector.broadcast %57 : vector<2x1xf32> to vector<2x512xf32>
    %59 = arith.mulf %58, %4 : vector<2x512xf32>
    %60 = arith.addf %59, %7 : vector<2x512xf32>
    %cst_13 = arith.constant dense<0.000000e+00> : vector<2x512xf32>
    %61 = tpu.matmul %55, %1, %cst_13 {dimension_numbers = #tpu.dot_dimension_numbers<[1], [0], [0], [1], [0, 0, 1, 1], [], []>} : vector<2x128xf32>, vector<128x512xf32>, vector<2x512xf32> -> vector<2x512xf32>
    %62 = arith.addf %60, %61 : vector<2x512xf32>
    %63 = vector.extract_strided_slice %62 {offsets = [0, 0], sizes = [2, 384], strides = [1, 1]} : vector<2x512xf32> to vector<2x384xf32>
    %64 = arith.negf %63 : vector<2x384xf32>
    %65 = math.exp %64 : vector<2x384xf32>
    %cst_14 = arith.constant 1.000000e+00 : f32
    %66 = vector.broadcast %cst_14 : f32 to vector<2x384xf32>
    %67 = arith.addf %66, %65 : vector<2x384xf32>
    %68 = arith.divf %66, %67 : vector<2x384xf32>
    %69 = vector.extract_strided_slice %62 {offsets = [0, 384], sizes = [2, 128], strides = [1, 1]} : vector<2x512xf32> to vector<2x128xf32>
    %70 = math.tanh %69 : vector<2x128xf32>
    %71 = vector.extract_strided_slice %68 {offsets = [0, 0], sizes = [2, 128], strides = [1, 1]} : vector<2x384xf32> to vector<2x128xf32>
    %72 = vector.extract_strided_slice %68 {offsets = [0, 128], sizes = [2, 128], strides = [1, 1]} : vector<2x384xf32> to vector<2x128xf32>
    %73 = vector.extract_strided_slice %68 {offsets = [0, 256], sizes = [2, 128], strides = [1, 1]} : vector<2x384xf32> to vector<2x128xf32>
    %74 = arith.mulf %72, %53 : vector<2x128xf32>
    %75 = arith.mulf %71, %70 : vector<2x128xf32>
    %76 = arith.addf %74, %75 : vector<2x128xf32>
    %77 = math.tanh %76 : vector<2x128xf32>
    %78 = arith.mulf %73, %77 : vector<2x128xf32>
    %79 = vector.extract_strided_slice %0 {offsets = [0, 3, 0], sizes = [2, 1, 1], strides = [1, 1, 1]} : vector<2x8x1xf32> to vector<2x1x1xf32>
    %80 = vector.shape_cast %79 : vector<2x1x1xf32> to vector<2x1xf32>
    %81 = vector.broadcast %80 : vector<2x1xf32> to vector<2x512xf32>
    %82 = arith.mulf %81, %4 : vector<2x512xf32>
    %83 = arith.addf %82, %7 : vector<2x512xf32>
    %cst_15 = arith.constant dense<0.000000e+00> : vector<2x512xf32>
    %84 = tpu.matmul %78, %1, %cst_15 {dimension_numbers = #tpu.dot_dimension_numbers<[1], [0], [0], [1], [0, 0, 1, 1], [], []>} : vector<2x128xf32>, vector<128x512xf32>, vector<2x512xf32> -> vector<2x512xf32>
    %85 = arith.addf %83, %84 : vector<2x512xf32>
    %86 = vector.extract_strided_slice %85 {offsets = [0, 0], sizes = [2, 384], strides = [1, 1]} : vector<2x512xf32> to vector<2x384xf32>
    %87 = arith.negf %86 : vector<2x384xf32>
    %88 = math.exp %87 : vector<2x384xf32>
    %cst_16 = arith.constant 1.000000e+00 : f32
    %89 = vector.broadcast %cst_16 : f32 to vector<2x384xf32>
    %90 = arith.addf %89, %88 : vector<2x384xf32>
    %91 = arith.divf %89, %90 : vector<2x384xf32>
    %92 = vector.extract_strided_slice %85 {offsets = [0, 384], sizes = [2, 128], strides = [1, 1]} : vector<2x512xf32> to vector<2x128xf32>
    %93 = math.tanh %92 : vector<2x128xf32>
    %94 = vector.extract_strided_slice %91 {offsets = [0, 0], sizes = [2, 128], strides = [1, 1]} : vector<2x384xf32> to vector<2x128xf32>
    %95 = vector.extract_strided_slice %91 {offsets = [0, 128], sizes = [2, 128], strides = [1, 1]} : vector<2x384xf32> to vector<2x128xf32>
    %96 = vector.extract_strided_slice %91 {offsets = [0, 256], sizes = [2, 128], strides = [1, 1]} : vector<2x384xf32> to vector<2x128xf32>
    %97 = arith.mulf %95, %76 : vector<2x128xf32>
    %98 = arith.mulf %94, %93 : vector<2x128xf32>
    %99 = arith.addf %97, %98 : vector<2x128xf32>
    %100 = math.tanh %99 : vector<2x128xf32>
    %101 = arith.mulf %96, %100 : vector<2x128xf32>
    %102 = vector.extract_strided_slice %0 {offsets = [0, 4, 0], sizes = [2, 1, 1], strides = [1, 1, 1]} : vector<2x8x1xf32> to vector<2x1x1xf32>
    %103 = vector.shape_cast %102 : vector<2x1x1xf32> to vector<2x1xf32>
    %104 = vector.broadcast %103 : vector<2x1xf32> to vector<2x512xf32>
    %105 = arith.mulf %104, %4 : vector<2x512xf32>
    %106 = arith.addf %105, %7 : vector<2x512xf32>
    %cst_17 = arith.constant dense<0.000000e+00> : vector<2x512xf32>
    %107 = tpu.matmul %101, %1, %cst_17 {dimension_numbers = #tpu.dot_dimension_numbers<[1], [0], [0], [1], [0, 0, 1, 1], [], []>} : vector<2x128xf32>, vector<128x512xf32>, vector<2x512xf32> -> vector<2x512xf32>
    %108 = arith.addf %106, %107 : vector<2x512xf32>
    %109 = vector.extract_strided_slice %108 {offsets = [0, 0], sizes = [2, 384], strides = [1, 1]} : vector<2x512xf32> to vector<2x384xf32>
    %110 = arith.negf %109 : vector<2x384xf32>
    %111 = math.exp %110 : vector<2x384xf32>
    %cst_18 = arith.constant 1.000000e+00 : f32
    %112 = vector.broadcast %cst_18 : f32 to vector<2x384xf32>
    %113 = arith.addf %112, %111 : vector<2x384xf32>
    %114 = arith.divf %112, %113 : vector<2x384xf32>
    %115 = vector.extract_strided_slice %108 {offsets = [0, 384], sizes = [2, 128], strides = [1, 1]} : vector<2x512xf32> to vector<2x128xf32>
    %116 = math.tanh %115 : vector<2x128xf32>
    %117 = vector.extract_strided_slice %114 {offsets = [0, 0], sizes = [2, 128], strides = [1, 1]} : vector<2x384xf32> to vector<2x128xf32>
    %118 = vector.extract_strided_slice %114 {offsets = [0, 128], sizes = [2, 128], strides = [1, 1]} : vector<2x384xf32> to vector<2x128xf32>
    %119 = vector.extract_strided_slice %114 {offsets = [0, 256], sizes = [2, 128], strides = [1, 1]} : vector<2x384xf32> to vector<2x128xf32>
    %120 = arith.mulf %118, %99 : vector<2x128xf32>
    %121 = arith.mulf %117, %116 : vector<2x128xf32>
    %122 = arith.addf %120, %121 : vector<2x128xf32>
    %123 = math.tanh %122 : vector<2x128xf32>
    %124 = arith.mulf %119, %123 : vector<2x128xf32>
    %125 = vector.extract_strided_slice %0 {offsets = [0, 5, 0], sizes = [2, 1, 1], strides = [1, 1, 1]} : vector<2x8x1xf32> to vector<2x1x1xf32>
    %126 = vector.shape_cast %125 : vector<2x1x1xf32> to vector<2x1xf32>
    %127 = vector.broadcast %126 : vector<2x1xf32> to vector<2x512xf32>
    %128 = arith.mulf %127, %4 : vector<2x512xf32>
    %129 = arith.addf %128, %7 : vector<2x512xf32>
    %cst_19 = arith.constant dense<0.000000e+00> : vector<2x512xf32>
    %130 = tpu.matmul %124, %1, %cst_19 {dimension_numbers = #tpu.dot_dimension_numbers<[1], [0], [0], [1], [0, 0, 1, 1], [], []>} : vector<2x128xf32>, vector<128x512xf32>, vector<2x512xf32> -> vector<2x512xf32>
    %131 = arith.addf %129, %130 : vector<2x512xf32>
    %132 = vector.extract_strided_slice %131 {offsets = [0, 0], sizes = [2, 384], strides = [1, 1]} : vector<2x512xf32> to vector<2x384xf32>
    %133 = arith.negf %132 : vector<2x384xf32>
    %134 = math.exp %133 : vector<2x384xf32>
    %cst_20 = arith.constant 1.000000e+00 : f32
    %135 = vector.broadcast %cst_20 : f32 to vector<2x384xf32>
    %136 = arith.addf %135, %134 : vector<2x384xf32>
    %137 = arith.divf %135, %136 : vector<2x384xf32>
    %138 = vector.extract_strided_slice %131 {offsets = [0, 384], sizes = [2, 128], strides = [1, 1]} : vector<2x512xf32> to vector<2x128xf32>
    %139 = math.tanh %138 : vector<2x128xf32>
    %140 = vector.extract_strided_slice %137 {offsets = [0, 0], sizes = [2, 128], strides = [1, 1]} : vector<2x384xf32> to vector<2x128xf32>
    %141 = vector.extract_strided_slice %137 {offsets = [0, 128], sizes = [2, 128], strides = [1, 1]} : vector<2x384xf32> to vector<2x128xf32>
    %142 = vector.extract_strided_slice %137 {offsets = [0, 256], sizes = [2, 128], strides = [1, 1]} : vector<2x384xf32> to vector<2x128xf32>
    %143 = arith.mulf %141, %122 : vector<2x128xf32>
    %144 = arith.mulf %140, %139 : vector<2x128xf32>
    %145 = arith.addf %143, %144 : vector<2x128xf32>
    %146 = math.tanh %145 : vector<2x128xf32>
    %147 = arith.mulf %142, %146 : vector<2x128xf32>
    %148 = vector.extract_strided_slice %0 {offsets = [0, 6, 0], sizes = [2, 1, 1], strides = [1, 1, 1]} : vector<2x8x1xf32> to vector<2x1x1xf32>
    %149 = vector.shape_cast %148 : vector<2x1x1xf32> to vector<2x1xf32>
    %150 = vector.broadcast %149 : vector<2x1xf32> to vector<2x512xf32>
    %151 = arith.mulf %150, %4 : vector<2x512xf32>
    %152 = arith.addf %151, %7 : vector<2x512xf32>
    %cst_21 = arith.constant dense<0.000000e+00> : vector<2x512xf32>
    %153 = tpu.matmul %147, %1, %cst_21 {dimension_numbers = #tpu.dot_dimension_numbers<[1], [0], [0], [1], [0, 0, 1, 1], [], []>} : vector<2x128xf32>, vector<128x512xf32>, vector<2x512xf32> -> vector<2x512xf32>
    %154 = arith.addf %152, %153 : vector<2x512xf32>
    %155 = vector.extract_strided_slice %154 {offsets = [0, 0], sizes = [2, 384], strides = [1, 1]} : vector<2x512xf32> to vector<2x384xf32>
    %156 = arith.negf %155 : vector<2x384xf32>
    %157 = math.exp %156 : vector<2x384xf32>
    %cst_22 = arith.constant 1.000000e+00 : f32
    %158 = vector.broadcast %cst_22 : f32 to vector<2x384xf32>
    %159 = arith.addf %158, %157 : vector<2x384xf32>
    %160 = arith.divf %158, %159 : vector<2x384xf32>
    %161 = vector.extract_strided_slice %154 {offsets = [0, 384], sizes = [2, 128], strides = [1, 1]} : vector<2x512xf32> to vector<2x128xf32>
    %162 = math.tanh %161 : vector<2x128xf32>
    %163 = vector.extract_strided_slice %160 {offsets = [0, 0], sizes = [2, 128], strides = [1, 1]} : vector<2x384xf32> to vector<2x128xf32>
    %164 = vector.extract_strided_slice %160 {offsets = [0, 128], sizes = [2, 128], strides = [1, 1]} : vector<2x384xf32> to vector<2x128xf32>
    %165 = vector.extract_strided_slice %160 {offsets = [0, 256], sizes = [2, 128], strides = [1, 1]} : vector<2x384xf32> to vector<2x128xf32>
    %166 = arith.mulf %164, %145 : vector<2x128xf32>
    %167 = arith.mulf %163, %162 : vector<2x128xf32>
    %168 = arith.addf %166, %167 : vector<2x128xf32>
    %169 = math.tanh %168 : vector<2x128xf32>
    %170 = arith.mulf %165, %169 : vector<2x128xf32>
    %171 = vector.extract_strided_slice %0 {offsets = [0, 7, 0], sizes = [2, 1, 1], strides = [1, 1, 1]} : vector<2x8x1xf32> to vector<2x1x1xf32>
    %172 = vector.shape_cast %171 : vector<2x1x1xf32> to vector<2x1xf32>
    %173 = vector.broadcast %172 : vector<2x1xf32> to vector<2x512xf32>
    %174 = arith.mulf %173, %4 : vector<2x512xf32>
    %175 = arith.addf %174, %7 : vector<2x512xf32>
    %cst_23 = arith.constant dense<0.000000e+00> : vector<2x512xf32>
    %176 = tpu.matmul %170, %1, %cst_23 {dimension_numbers = #tpu.dot_dimension_numbers<[1], [0], [0], [1], [0, 0, 1, 1], [], []>} : vector<2x128xf32>, vector<128x512xf32>, vector<2x512xf32> -> vector<2x512xf32>
    %177 = arith.addf %175, %176 : vector<2x512xf32>
    %178 = vector.extract_strided_slice %177 {offsets = [0, 0], sizes = [2, 384], strides = [1, 1]} : vector<2x512xf32> to vector<2x384xf32>
    %179 = arith.negf %178 : vector<2x384xf32>
    %180 = math.exp %179 : vector<2x384xf32>
    %cst_24 = arith.constant 1.000000e+00 : f32
    %181 = vector.broadcast %cst_24 : f32 to vector<2x384xf32>
    %182 = arith.addf %181, %180 : vector<2x384xf32>
    %183 = arith.divf %181, %182 : vector<2x384xf32>
    %184 = vector.extract_strided_slice %177 {offsets = [0, 384], sizes = [2, 128], strides = [1, 1]} : vector<2x512xf32> to vector<2x128xf32>
    %185 = math.tanh %184 : vector<2x128xf32>
    %186 = vector.extract_strided_slice %183 {offsets = [0, 0], sizes = [2, 128], strides = [1, 1]} : vector<2x384xf32> to vector<2x128xf32>
    %187 = vector.extract_strided_slice %183 {offsets = [0, 128], sizes = [2, 128], strides = [1, 1]} : vector<2x384xf32> to vector<2x128xf32>
    %188 = vector.extract_strided_slice %183 {offsets = [0, 256], sizes = [2, 128], strides = [1, 1]} : vector<2x384xf32> to vector<2x128xf32>
    %189 = arith.mulf %187, %168 : vector<2x128xf32>
    %190 = arith.mulf %186, %185 : vector<2x128xf32>
    %191 = arith.addf %189, %190 : vector<2x128xf32>
    %192 = math.tanh %191 : vector<2x128xf32>
    %193 = arith.mulf %188, %192 : vector<2x128xf32>
    %c0_25 = arith.constant 0 : index
    %c0_26 = arith.constant 0 : index
    %194 = vector.load %arg4[%c0_25, %c0_26] : memref<1x128xf32, #tpu.memory_space<vmem>>, vector<1x128xf32>
    %195 = vector.broadcast %194 : vector<1x128xf32> to vector<2x128xf32>
    %196 = arith.mulf %193, %195 : vector<2x128xf32>
    %cst_27 = arith.constant dense<0.000000e+00> : vector<2xf32>
    %197 = vector.multi_reduction <add>, %196, %cst_27 [1] : vector<2x128xf32> to vector<2xf32>
    %198 = vector.shape_cast %197 : vector<2xf32> to vector<2x1xf32>
    %c0_28 = arith.constant 0 : index
    %c0_29 = arith.constant 0 : index
    %199 = vector.load %arg5[%c0_28, %c0_29] : memref<1x1xf32, #tpu.memory_space<vmem>>, vector<1x1xf32>
    %200 = vector.broadcast %199 : vector<1x1xf32> to vector<2x1xf32>
    %201 = arith.addf %198, %200 : vector<2x1xf32>
    %c0_30 = arith.constant 0 : index
    %c0_31 = arith.constant 0 : index
    %202 = vector.load %arg6[%c0_30, %c0_31] : memref<2x1xf32, #tpu.memory_space<vmem>>, vector<2x1xf32>
    tpu.vector_store %arg6[%c0_30, %c0_31], %201 {strides = array<i32>} : memref<2x1xf32, #tpu.memory_space<vmem>>, vector<2x1xf32>,
    return
  }
}

</mosaic_0001>

<llo_original>
// kernel: lstm_model_forward.1
$region0: #{lstm_model_forward.1}
  #allocation0 [shape = 'u32[]', space=smem, size = 0x4, offset = 0x4, fixed_abs, tag = 'smem constant byte address 0x4 - core index']
  #allocation1 [shape = 'u32[72,128]{1,0:T(1,128)}', space=vmem, size = 0x9000, scoped, tag = 'internal scratch']
  #allocation2 [shape = 'f32[1,1]{1,0:T(1,128)S(1)}', space=vmem, size = 0x200, scoped, tag = 'scoped memory for lstm_model_forward.1']
  %s0 = inlined_call_operand.vmem [shape: f32[2,8,1], index: 0, kind: input, shape index: {}]
  %s1 = inlined_call_operand.vmem [shape: f32[1,512], index: 1, kind: input, shape index: {}]
  %s2 = inlined_call_operand.vmem [shape: f32[1,512], index: 2, kind: input, shape index: {}]
  %s3 = inlined_call_operand.hbm [shape: f32[128,512], index: 3, kind: input, shape index: {}]
  %s4 = inlined_call_operand.vmem [shape: f32[1,128], index: 4, kind: input, shape index: {}]
  %s5 = inlined_call_operand.<no memory space> [shape: f32[1,1], index: 5, kind: input, shape index: {}]
  %s6 = inlined_call_operand.vmem [shape: f32[2,1], index: 6, kind: output, shape index: {}]
  %s7 = sld [smem:[#allocation0]]
  $region38: #{lstm_model_forward.1} parent=0
    _
  %s9 = ssub.s32 1, %s7
  %s10 = scalar_select 0, %s9, %s7
  %v11 = vstv %s5
  %12 = vst [vmem:[#allocation2] sm:$0x1] %v11
  $region1: #{lstm_model_forward.1} parent=0
    #allocation3 [shape = 'u8[262144]{0}', space=vmem, size = 0x40000, scoped, tag = 'input window, operand 3, single buffered']
    #allocation4 [shape = 's32[1]{0}', space=sflag, size = 0x4, scoped, tag = 'scoped memory for lstm_model_forward.1']
    %13 = vsyncpa [#allocation4], 0
    // Predicated region
    $region2: #{lstm_model_forward.1} parent=1 // pred_check
      _
    $region3: #{lstm_model_forward.1} parent=1 // pred_check_branch
      %15 = sbr.rel (0) target = $region5
    $region4: #{lstm_model_forward.1} parent=1 // pred_region
      _
    $region5: #{lstm_model_forward.1} parent=1 // pred_fallthru
      _
    // Predicated region
    $region6: #{lstm_model_forward.1} parent=1 // pred_check
      _
    $region7: #{lstm_model_forward.1} parent=1 // pred_check_branch
      %17 = sbr.rel (0) target = $region9
    $region8: #{lstm_model_forward.1} parent=1 // pred_region
      _
    $region9: #{lstm_model_forward.1} parent=1 // pred_fallthru
      _
    // Predicated region
    $region10: #{lstm_model_forward.1} parent=1 // pred_check
      _
    $region11: #{lstm_model_forward.1} parent=1 // pred_check_branch
      %19 = sbr.rel (0) target = $region13
    $region12: #{lstm_model_forward.1} parent=1 // pred_region
      _
    $region13: #{lstm_model_forward.1} parent=1 // pred_fallthru
      _
    // Predicated region
    $region14: #{lstm_model_forward.1} parent=1 // pred_check
      _
    $region15: #{lstm_model_forward.1} parent=1 // pred_check_branch
      %21 = sbr.rel (0) target = $region17
    $region16: #{lstm_model_forward.1} parent=1 // pred_region
      %23 = vsyncadd [#allocation4], 0
      %s24 = sshll.u32 %s3, 4
      %s25 = int_to_ptr.hbm [resolvable:$true] %s24
      %s26 = sshll.u32 [#allocation3], 4
      %s27 = int_to_ptr.vmem [resolvable:$true] %s26
      %32 = dma.hbm_to_vmem [thread:$0]  %s25, 8192, %s27, [#allocation4], 512, 512, 32
    $region17: #{lstm_model_forward.1} parent=1 // pred_fallthru
      _
    // Predicated region
    $region18: #{lstm_model_forward.1} parent=1 // pred_check
      _
    $region19: #{lstm_model_forward.1} parent=1 // pred_check_branch
      %34 = sbr.rel (0) target = $region21
    $region20: #{lstm_model_forward.1} parent=1 // pred_region
      _
    $region21: #{lstm_model_forward.1} parent=1 // pred_fallthru
      _
    // Predicated region
    $region22: #{lstm_model_forward.1} parent=1 // pred_check
      _
    $region23: #{lstm_model_forward.1} parent=1 // pred_check_branch
      %36 = sbr.rel (0) target = $region25
    $region24: #{lstm_model_forward.1} parent=1 // pred_region
      _
    $region25: #{lstm_model_forward.1} parent=1 // pred_fallthru
      _
    // Predicated region
    $region26: #{lstm_model_forward.1} parent=1 // pred_check
      _
    $region27: #{lstm_model_forward.1} parent=1 // pred_check_branch
      %38 = sbr.rel (0) target = $region29
    $region28: #{lstm_model_forward.1} parent=1 // pred_region
      %40 = dma.done [#allocation4], 8192
    $region29: #{lstm_model_forward.1} parent=1 // pred_fallthru
      _
    %v41 = vld [vmem:[%s0] sm:$0xff]
    %v42 = vld [vmem:[%s0 + $0x8] sm:$0xff]
    %v43 = vld [vmem:[#allocation3] sm:$0xff]
    %v44 = vld [vmem:[#allocation3 + $0x8] sm:$0xff]
    %v45 = vld [vmem:[#allocation3 + $0x10] sm:$0xff]
    %v46 = vld [vmem:[#allocation3 + $0x18] sm:$0xff]
    %v47 = vld [vmem:[#allocation3 + $0x20] sm:$0xff]
    %v48 = vld [vmem:[#allocation3 + $0x28] sm:$0xff]
    %v49 = vld [vmem:[#allocation3 + $0x30] sm:$0xff]
    %v50 = vld [vmem:[#allocation3 + $0x38] sm:$0xff]
    %v51 = vld [vmem:[#allocation3 + $0x40] sm:$0xff]
    %v52 = vld [vmem:[#allocation3 + $0x48] sm:$0xff]
    %v53 = vld [vmem:[#allocation3 + $0x50] sm:$0xff]
    %v54 = vld [vmem:[#allocation3 + $0x58] sm:$0xff]
    %v55 = vld [vmem:[#allocation3 + $0x60] sm:$0xff]
    %v56 = vld [vmem:[#allocation3 + $0x68] sm:$0xff]
    %v57 = vld [vmem:[#allocation3 + $0x70] sm:$0xff]
    %v58 = vld [vmem:[#allocation3 + $0x78] sm:$0xff]
    %v59 = vld [vmem:[#allocation3 + $0x80] sm:$0xff]
    %v60 = vld [vmem:[#allocation3 + $0x88] sm:$0xff]
    %v61 = vld [vmem:[#allocation3 + $0x90] sm:$0xff]
    %v62 = vld [vmem:[#allocation3 + $0x98] sm:$0xff]
    %v63 = vld [vmem:[#allocation3 + $0xa0] sm:$0xff]
    %v64 = vld [vmem:[#allocation3 + $0xa8] sm:$0xff]
    %v65 = vld [vmem:[#allocation3 + $0xb0] sm:$0xff]
    %v66 = vld [vmem:[#allocation3 + $0xb8] sm:$0xff]
    %v67 = vld [vmem:[#allocation3 + $0xc0] sm:$0xff]
    %v68 = vld [vmem:[#allocation3 + $0xc8] sm:$0xff]
    %v69 = vld [vmem:[#allocation3 + $0xd0] sm:$0xff]
    %v70 = vld [vmem:[#allocation3 + $0xd8] sm:$0xff]
    %v71 = vld [vmem:[#allocation3 + $0xe0] sm:$0xff]
    %v72 = vld [vmem:[#allocation3 + $0xe8] sm:$0xff]
    %v73 = vld [vmem:[#allocation3 + $0xf0] sm:$0xff]
    %v74 = vld [vmem:[#allocation3 + $0xf8] sm:$0xff]
    %v75 = vld [vmem:[#allocation3 + $0x100] sm:$0xff]
    %v76 = vld [vmem:[#allocation3 + $0x108] sm:$0xff]
    %v77 = vld [vmem:[#allocation3 + $0x110] sm:$0xff]
    %v78 = vld [vmem:[#allocation3 + $0x118] sm:$0xff]
    %v79 = vld [vmem:[#allocation3 + $0x120] sm:$0xff]
    %v80 = vld [vmem:[#allocation3 + $0x128] sm:$0xff]
    %v81 = vld [vmem:[#allocation3 + $0x130] sm:$0xff]
    %v82 = vld [vmem:[#allocation3 + $0x138] sm:$0xff]
    %v83 = vld [vmem:[#allocation3 + $0x140] sm:$0xff]
    %v84 = vld [vmem:[#allocation3 + $0x148] sm:$0xff]
    %v85 = vld [vmem:[#allocation3 + $0x150] sm:$0xff]
    %v86 = vld [vmem:[#allocation3 + $0x158] sm:$0xff]
    %v87 = vld [vmem:[#allocation3 + $0x160] sm:$0xff]
    %v88 = vld [vmem:[#allocation3 + $0x168] sm:$0xff]
    %v89 = vld [vmem:[#allocation3 + $0x170] sm:$0xff]
    %v90 = vld [vmem:[#allocation3 + $0x178] sm:$0xff]
    %v91 = vld [vmem:[#allocation3 + $0x180] sm:$0xff]
    %v92 = vld [vmem:[#allocation3 + $0x188] sm:$0xff]
    %v93 = vld [vmem:[#allocation3 + $0x190] sm:$0xff]
    %v94 = vld [vmem:[#allocation3 + $0x198] sm:$0xff]
    %v95 = vld [vmem:[#allocation3 + $0x1a0] sm:$0xff]
    %v96 = vld [vmem:[#allocation3 + $0x1a8] sm:$0xff]
    %v97 = vld [vmem:[#allocation3 + $0x1b0] sm:$0xff]
    %v98 = vld [vmem:[#allocation3 + $0x1b8] sm:$0xff]
    %v99 = vld [vmem:[#allocation3 + $0x1c0] sm:$0xff]
    %v100 = vld [vmem:[#allocation3 + $0x1c8] sm:$0xff]
    %v101 = vld [vmem:[#allocation3 + $0x1d0] sm:$0xff]
    %v102 = vld [vmem:[#allocation3 + $0x1d8] sm:$0xff]
    %v103 = vld [vmem:[#allocation3 + $0x1e0] sm:$0xff]
    %v104 = vld [vmem:[#allocation3 + $0x1e8] sm:$0xff]
    %v105 = vld [vmem:[#allocation3 + $0x1f0] sm:$0xff]
    %v106 = vld [vmem:[#allocation3 + $0x1f8] sm:$0xff]
    %v107 = vld [vmem:[%s1] sm:$0xf]
    %v109 = vperm.slane %v107, 0
    %v110 = vperm.slane %v107, 1
    %v111 = vperm.slane %v107, 2
    %v112 = vperm.slane %v107, 3
    %v117 = vld [vmem:[%s2] sm:$0xf]
    %v119 = vperm.slane %v117, 0
    %v120 = vperm.slane %v117, 1
    %v121 = vperm.slane %v117, 2
    %v122 = vperm.slane %v117, 3
    %128 = vset.pattern.permute.xlu0 0
    %129 = vperm.xlu0 %128, %v41
    %v130 = vpop.permute.xlu0 %129
    %133 = vset.pattern.permute.xlu0 0
    %134 = vperm.xlu0 %133, %v42
    %v135 = vpop.permute.xlu0 %134
    %v137 = vmul.f32 %v130, %v109
    %v138 = vmul.f32 %v130, %v110
    %v139 = vmul.f32 %v130, %v111
    %v140 = vmul.f32 %v130, %v112
    %v141 = vmul.f32 %v135, %v109
    %v142 = vmul.f32 %v135, %v110
    %v143 = vmul.f32 %v135, %v111
    %v144 = vmul.f32 %v135, %v112
    %v145 = vadd.f32 %v137, %v119
    %v146 = vadd.f32 %v138, %v120
    %v147 = vadd.f32 %v139, %v121
    %v148 = vadd.f32 %v140, %v122
    %v149 = vadd.f32 %v141, %v119
    %v150 = vadd.f32 %v142, %v120
    %v151 = vadd.f32 %v143, %v121
    %v152 = vadd.f32 %v144, %v122
    %153 = vmatpush.msra.mxu0 %v103
    %154 = vmatpush.msra.mxu0 %v99
    %155 = vmatpush.msra.mxu0 %v95
    %156 = vmatpush.msra.mxu0 %v91
    %157 = vmatpush.msra.mxu0 %v87
    %158 = vmatpush.msra.mxu0 %v83
    %159 = vmatpush.msra.mxu0 %v79
    %160 = vmatpush.msra.mxu0 %v75
    %161 = vmatpush.msra.mxu0 %v71
    %162 = vmatpush.msra.mxu0 %v67
    %163 = vmatpush.msra.mxu0 %v63
    %164 = vmatpush.msra.mxu0 %v59
    %165 = vmatpush.msra.mxu0 %v55
    %166 = vmatpush.msra.mxu0 %v51
    %167 = vmatpush.msra.mxu0 %v47
    %168 = vmatpush.msra.mxu0 %v43
    %169 = vmatmul.f32.gmra.mxu0 0.0
    %v170 = vpop.f32.mrf.mxu0
    %v171 = vadd.f32 0.0, %v170
    %172 = vdwg.mxu0
    %173 = vmatpush.msra.mxu0 %v104
    %174 = vmatpush.msra.mxu0 %v100
    %175 = vmatpush.msra.mxu0 %v96
    %176 = vmatpush.msra.mxu0 %v92
    %177 = vmatpush.msra.mxu0 %v88
    %178 = vmatpush.msra.mxu0 %v84
    %179 = vmatpush.msra.mxu0 %v80
    %180 = vmatpush.msra.mxu0 %v76
    %181 = vmatpush.msra.mxu0 %v72
    %182 = vmatpush.msra.mxu0 %v68
    %183 = vmatpush.msra.mxu0 %v64
    %184 = vmatpush.msra.mxu0 %v60
    %185 = vmatpush.msra.mxu0 %v56
    %186 = vmatpush.msra.mxu0 %v52
    %187 = vmatpush.msra.mxu0 %v48
    %188 = vmatpush.msra.mxu0 %v44
    %189 = vmatmul.f32.gmra.mxu0 0.0
    %v190 = vpop.f32.mrf.mxu0
    %v191 = vadd.f32 0.0, %v190
    %192 = vdwg.mxu0
    %193 = vmatpush.msra.mxu0 %v105
    %194 = vmatpush.msra.mxu0 %v101
    %195 = vmatpush.msra.mxu0 %v97
    %196 = vmatpush.msra.mxu0 %v93
    %197 = vmatpush.msra.mxu0 %v89
    %198 = vmatpush.msra.mxu0 %v85
    %199 = vmatpush.msra.mxu0 %v81
    %200 = vmatpush.msra.mxu0 %v77
    %201 = vmatpush.msra.mxu0 %v73
    %202 = vmatpush.msra.mxu0 %v69
    %203 = vmatpush.msra.mxu0 %v65
    %204 = vmatpush.msra.mxu0 %v61
    %205 = vmatpush.msra.mxu0 %v57
    %206 = vmatpush.msra.mxu0 %v53
    %207 = vmatpush.msra.mxu0 %v49
    %208 = vmatpush.msra.mxu0 %v45
    %209 = vmatmul.f32.gmra.mxu0 0.0
    %v210 = vpop.f32.mrf.mxu0
    %v211 = vadd.f32 0.0, %v210
    %212 = vdwg.mxu0
    %213 = vmatpush.msra.mxu0 %v106
    %214 = vmatpush.msra.mxu0 %v102
    %215 = vmatpush.msra.mxu0 %v98
    %216 = vmatpush.msra.mxu0 %v94
    %217 = vmatpush.msra.mxu0 %v90
    %218 = vmatpush.msra.mxu0 %v86
    %219 = vmatpush.msra.mxu0 %v82
    %220 = vmatpush.msra.mxu0 %v78
    %221 = vmatpush.msra.mxu0 %v74
    %222 = vmatpush.msra.mxu0 %v70
    %223 = vmatpush.msra.mxu0 %v66
    %224 = vmatpush.msra.mxu0 %v62
    %225 = vmatpush.msra.mxu0 %v58
    %226 = vmatpush.msra.mxu0 %v54
    %227 = vmatpush.msra.mxu0 %v50
    %228 = vmatpush.msra.mxu0 %v46
    %229 = vmatmul.f32.gmra.mxu0 0.0
    %v230 = vpop.f32.mrf.mxu0
    %v231 = vadd.f32 0.0, %v230
    %232 = vdwg.mxu0
    %v237 = vrot.slane %v171, 1
    %v238 = vrot.slane %v191, 1
    %v239 = vrot.slane %v211, 1
    %v240 = vrot.slane %v231, 1
    %v249 = vadd.f32 %v145, %v171
    %v250 = vadd.f32 %v146, %v191
    %v251 = vadd.f32 %v147, %v211
    %v252 = vadd.f32 %v148, %v231
    %v253 = vadd.f32 %v149, %v237
    %v254 = vadd.f32 %v150, %v238
    %v255 = vadd.f32 %v151, %v239
    %v256 = vadd.f32 %v152, %v240
    %v257 = vxor.u32 %v249, 2147483648
    %v258 = vxor.u32 %v250, 2147483648
    %v259 = vxor.u32 %v251, 2147483648
    %v260 = vxor.u32 %v253, 2147483648
    %v261 = vxor.u32 %v254, 2147483648
    %v262 = vxor.u32 %v255, 2147483648
    %v263 = vmul.f32 %v257, 1.442695
    %v264 = vpow.pop %v263
    %v265 = vmul.f32 %v258, 1.442695
    %v266 = vpow.pop %v265
    %v267 = vmul.f32 %v259, 1.442695
    %v268 = vpow.pop %v267
    %v269 = vmul.f32 %v260, 1.442695
    %v270 = vpow.pop %v269
    %v271 = vmul.f32 %v261, 1.442695
    %v272 = vpow.pop %v271
    %v273 = vmul.f32 %v262, 1.442695
    %v274 = vpow.pop %v273
    %v275 = vadd.f32 %v264, 1.0
    %v276 = vadd.f32 %v266, 1.0
    %v277 = vadd.f32 %v268, 1.0
    %v278 = vadd.f32 %v270, 1.0
    %v279 = vadd.f32 %v272, 1.0
    %v280 = vadd.f32 %v274, 1.0
    %v281 = vrcp.pop %v275
    %v282 = vmul.f32 %v275, %v281
    %v283 = vsub.f32 1.0, %v282
    %v284 = vmul.f32 %v281, %v283
    %v285 = vadd.f32 %v281, %v284
    %vm286 = vweird.f32 %v275
    %vm287 = vweird.f32 %v281
    %vm288 = vmor %vm286, %vm287
    %v289 = vsel %vm288, %v281, %v285
    %v290 = vand.u32 2147483647, %v275
    %vm291 = vcmp.eq.f32.partialorder %v290, 8.507059e+37
    %v292 = vand.u32 %v275, 2147483648
    %v293 = vor.u32 1.1754944e-38, %v292
    %v294 = vsel %vm291, %v293, %v289
    %v295 = vmul.f32 1.0, %v294
    %v296 = vrcp.pop %v276
    %v297 = vmul.f32 %v276, %v296
    %v298 = vsub.f32 1.0, %v297
    %v299 = vmul.f32 %v296, %v298
    %v300 = vadd.f32 %v296, %v299
    %vm301 = vweird.f32 %v276
    %vm302 = vweird.f32 %v296
    %vm303 = vmor %vm301, %vm302
    %v304 = vsel %vm303, %v296, %v300
    %v305 = vand.u32 2147483647, %v276
    %vm306 = vcmp.eq.f32.partialorder %v305, 8.507059e+37
    %v307 = vand.u32 %v276, 2147483648
    %v308 = vor.u32 1.1754944e-38, %v307
    %v309 = vsel %vm306, %v308, %v304
    %v310 = vmul.f32 1.0, %v309
    %v311 = vrcp.pop %v277
    %v312 = vmul.f32 %v277, %v311
    %v313 = vsub.f32 1.0, %v312
    %v314 = vmul.f32 %v311, %v313
    %v315 = vadd.f32 %v311, %v314
    %vm316 = vweird.f32 %v277
    %vm317 = vweird.f32 %v311
    %vm318 = vmor %vm316, %vm317
    %v319 = vsel %vm318, %v311, %v315
    %v320 = vand.u32 2147483647, %v277
    %vm321 = vcmp.eq.f32.partialorder %v320, 8.507059e+37
    %v322 = vand.u32 %v277, 2147483648
    %v323 = vor.u32 1.1754944e-38, %v322
    %v324 = vsel %vm321, %v323, %v319
    %v325 = vmul.f32 1.0, %v324
    %v326 = vrcp.pop %v278
    %v327 = vmul.f32 %v278, %v326
    %v328 = vsub.f32 1.0, %v327
    %v329 = vmul.f32 %v326, %v328
    %v330 = vadd.f32 %v326, %v329
    %vm331 = vweird.f32 %v278
    %vm332 = vweird.f32 %v326
    %vm333 = vmor %vm331, %vm332
    %v334 = vsel %vm333, %v326, %v330
    %v335 = vand.u32 2147483647, %v278
    %vm336 = vcmp.eq.f32.partialorder %v335, 8.507059e+37
    %v337 = vand.u32 %v278, 2147483648
    %v338 = vor.u32 1.1754944e-38, %v337
    %v339 = vsel %vm336, %v338, %v334
    %v340 = vmul.f32 1.0, %v339
    %v341 = vrcp.pop %v279
    %v342 = vmul.f32 %v279, %v341
    %v343 = vsub.f32 1.0, %v342
    %v344 = vmul.f32 %v341, %v343
    %v345 = vadd.f32 %v341, %v344
    %vm346 = vweird.f32 %v279
    %vm347 = vweird.f32 %v341
    %vm348 = vmor %vm346, %vm347
    %v349 = vsel %vm348, %v341, %v345
    %v350 = vand.u32 2147483647, %v279
    %vm351 = vcmp.eq.f32.partialorder %v350, 8.507059e+37
    %v352 = vand.u32 %v279, 2147483648
    %v353 = vor.u32 1.1754944e-38, %v352
    %v354 = vsel %vm351, %v353, %v349
    %v355 = vmul.f32 1.0, %v354
    %v356 = vrcp.pop %v280
    %v357 = vmul.f32 %v280, %v356
    %v358 = vsub.f32 1.0, %v357
    %v359 = vmul.f32 %v356, %v358
    %v360 = vadd.f32 %v356, %v359
    %vm361 = vweird.f32 %v280
    %vm362 = vweird.f32 %v356
    %vm363 = vmor %vm361, %vm362
    %v364 = vsel %vm363, %v356, %v360
    %v365 = vand.u32 2147483647, %v280
    %vm366 = vcmp.eq.f32.partialorder %v365, 8.507059e+37
    %v367 = vand.u32 %v280, 2147483648
    %v368 = vor.u32 1.1754944e-38, %v367
    %v369 = vsel %vm366, %v368, %v364
    %v370 = vmul.f32 1.0, %v369
    %v371 = vtanh.pop %v252
    %v372 = vtanh.pop %v256
    %v373 = vmul.f32 %v310, 0.0
    %v374 = vmul.f32 %v355, 0.0
    %v375 = vmul.f32 %v295, %v371
    %v376 = vmul.f32 %v340, %v372
    %v377 = vadd.f32 %v373, %v375
    %v378 = vadd.f32 %v374, %v376
    %v379 = vtanh.pop %v377
    %v380 = vtanh.pop %v378
    %v381 = vmul.f32 %v325, %v379
    %v382 = vmul.f32 %v370, %v380
    %v385 = vrot.slane %v382, 7
    %vm386 = vcmask 1041409
    %v387 = vsel %vm386, %v385, %v381
    %389 = vmatpush.msra.mxu0 %v103
    %390 = vmatpush.msra.mxu0 %v99
    %391 = vmatpush.msra.mxu0 %v95
    %392 = vmatpush.msra.mxu0 %v91
    %393 = vmatpush.msra.mxu0 %v87
    %394 = vmatpush.msra.mxu0 %v83
    %395 = vmatpush.msra.mxu0 %v79
    %396 = vmatpush.msra.mxu0 %v75
    %397 = vmatpush.msra.mxu0 %v71
    %398 = vmatpush.msra.mxu0 %v67
    %399 = vmatpush.msra.mxu0 %v63
    %400 = vmatpush.msra.mxu0 %v59
    %401 = vmatpush.msra.mxu0 %v55
    %402 = vmatpush.msra.mxu0 %v51
    %403 = vmatpush.msra.mxu0 %v47
    %404 = vmatpush.msra.mxu0 %v43
    %405 = vmatmul.f32.gmra.mxu0 %v387
    %v406 = vpop.f32.mrf.mxu0
    %v407 = vadd.f32 0.0, %v406
    %408 = vdwg.mxu0
    %409 = vmatpush.msra.mxu0 %v104
    %410 = vmatpush.msra.mxu0 %v100
    %411 = vmatpush.msra.mxu0 %v96
    %412 = vmatpush.msra.mxu0 %v92
    %413 = vmatpush.msra.mxu0 %v88
    %414 = vmatpush.msra.mxu0 %v84
    %415 = vmatpush.msra.mxu0 %v80
    %416 = vmatpush.msra.mxu0 %v76
    %417 = vmatpush.msra.mxu0 %v72
    %418 = vmatpush.msra.mxu0 %v68
    %419 = vmatpush.msra.mxu0 %v64
    %420 = vmatpush.msra.mxu0 %v60
    %421 = vmatpush.msra.mxu0 %v56
    %422 = vmatpush.msra.mxu0 %v52
    %423 = vmatpush.msra.mxu0 %v48
    %424 = vmatpush.msra.mxu0 %v44
    %425 = vmatmul.f32.gmra.mxu0 %v387
    %v426 = vpop.f32.mrf.mxu0
    %v427 = vadd.f32 0.0, %v426
    %428 = vdwg.mxu0
    %429 = vmatpush.msra.mxu0 %v105
    %430 = vmatpush.msra.mxu0 %v101
    %431 = vmatpush.msra.mxu0 %v97
    %432 = vmatpush.msra.mxu0 %v93
    %433 = vmatpush.msra.mxu0 %v89
    %434 = vmatpush.msra.mxu0 %v85
    %435 = vmatpush.msra.mxu0 %v81
    %436 = vmatpush.msra.mxu0 %v77
    %437 = vmatpush.msra.mxu0 %v73
    %438 = vmatpush.msra.mxu0 %v69
    %439 = vmatpush.msra.mxu0 %v65
    %440 = vmatpush.msra.mxu0 %v61
    %441 = vmatpush.msra.mxu0 %v57
    %442 = vmatpush.msra.mxu0 %v53
    %443 = vmatpush.msra.mxu0 %v49
    %444 = vmatpush.msra.mxu0 %v45
    %445 = vmatmul.f32.gmra.mxu0 %v387
    %v446 = vpop.f32.mrf.mxu0
    %v447 = vadd.f32 0.0, %v446
    %448 = vdwg.mxu0
    %449 = vmatpush.msra.mxu0 %v106
    %450 = vmatpush.msra.mxu0 %v102
    %451 = vmatpush.msra.mxu0 %v98
    %452 = vmatpush.msra.mxu0 %v94
    %453 = vmatpush.msra.mxu0 %v90
    %454 = vmatpush.msra.mxu0 %v86
    %455 = vmatpush.msra.mxu0 %v82
    %456 = vmatpush.msra.mxu0 %v78
    %457 = vmatpush.msra.mxu0 %v74
    %458 = vmatpush.msra.mxu0 %v70
    %459 = vmatpush.msra.mxu0 %v66
    %460 = vmatpush.msra.mxu0 %v62
    %461 = vmatpush.msra.mxu0 %v58
    %462 = vmatpush.msra.mxu0 %v54
    %463 = vmatpush.msra.mxu0 %v50
    %464 = vmatpush.msra.mxu0 %v46
    %465 = vmatmul.f32.gmra.mxu0 %v387
    %v466 = vpop.f32.mrf.mxu0
    %v467 = vadd.f32 0.0, %v466
    %468 = vdwg.mxu0
    %v473 = vrot.slane %v407, 7
    %v474 = vrot.slane %v427, 7
    %v475 = vrot.slane %v447, 7
    %v476 = vrot.slane %v467, 7
    %v485 = vadd.f32 %v145, %v473
    %v486 = vadd.f32 %v146, %v474
    %v487 = vadd.f32 %v147, %v475
    %v488 = vadd.f32 %v148, %v476
    %v489 = vadd.f32 %v149, %v407
    %v490 = vadd.f32 %v150, %v427
    %v491 = vadd.f32 %v151, %v447
    %v492 = vadd.f32 %v152, %v467
    %v493 = vxor.u32 %v485, 2147483648
    %v494 = vxor.u32 %v486, 2147483648
    %v495 = vxor.u32 %v487, 2147483648
    %v496 = vxor.u32 %v489, 2147483648
    %v497 = vxor.u32 %v490, 2147483648
    %v498 = vxor.u32 %v491, 2147483648
    %v499 = vmul.f32 %v493, 1.442695
    %v500 = vpow.pop %v499
    %v501 = vmul.f32 %v494, 1.442695
    %v502 = vpow.pop %v501
    %v503 = vmul.f32 %v495, 1.442695
    %v504 = vpow.pop %v503
    %v505 = vmul.f32 %v496, 1.442695
    %v506 = vpow.pop %v505
    %v507 = vmul.f32 %v497, 1.442695
    %v508 = vpow.pop %v507
    %v509 = vmul.f32 %v498, 1.442695
    %v510 = vpow.pop %v509
    %v511 = vadd.f32 %v500, 1.0
    %v512 = vadd.f32 %v502, 1.0
    %v513 = vadd.f32 %v504, 1.0
    %v514 = vadd.f32 %v506, 1.0
    %v515 = vadd.f32 %v508, 1.0
    %v516 = vadd.f32 %v510, 1.0
    %v517 = vrcp.pop %v511
    %v518 = vmul.f32 %v511, %v517
    %v519 = vsub.f32 1.0, %v518
    %v520 = vmul.f32 %v517, %v519
    %v521 = vadd.f32 %v517, %v520
    %vm522 = vweird.f32 %v511
    %vm523 = vweird.f32 %v517
    %vm524 = vmor %vm522, %vm523
    %v525 = vsel %vm524, %v517, %v521
    %v526 = vand.u32 2147483647, %v511
    %vm527 = vcmp.eq.f32.partialorder %v526, 8.507059e+37
    %v528 = vand.u32 %v511, 2147483648
    %v529 = vor.u32 1.1754944e-38, %v528
    %v530 = vsel %vm527, %v529, %v525
    %v531 = vmul.f32 1.0, %v530
    %v532 = vrcp.pop %v512
    %v533 = vmul.f32 %v512, %v532
    %v534 = vsub.f32 1.0, %v533
    %v535 = vmul.f32 %v532, %v534
    %v536 = vadd.f32 %v532, %v535
    %vm537 = vweird.f32 %v512
    %vm538 = vweird.f32 %v532
    %vm539 = vmor %vm537, %vm538
    %v540 = vsel %vm539, %v532, %v536
    %v541 = vand.u32 2147483647, %v512
    %vm542 = vcmp.eq.f32.partialorder %v541, 8.507059e+37
    %v543 = vand.u32 %v512, 2147483648
    %v544 = vor.u32 1.1754944e-38, %v543
    %v545 = vsel %vm542, %v544, %v540
    %v546 = vmul.f32 1.0, %v545
    %v547 = vrcp.pop %v513
    %v548 = vmul.f32 %v513, %v547
    %v549 = vsub.f32 1.0, %v548
    %v550 = vmul.f32 %v547, %v549
    %v551 = vadd.f32 %v547, %v550
    %vm552 = vweird.f32 %v513
    %vm553 = vweird.f32 %v547
    %vm554 = vmor %vm552, %vm553
    %v555 = vsel %vm554, %v547, %v551
    %v556 = vand.u32 2147483647, %v513
    %vm557 = vcmp.eq.f32.partialorder %v556, 8.507059e+37
    %v558 = vand.u32 %v513, 2147483648
    %v559 = vor.u32 1.1754944e-38, %v558
    %v560 = vsel %vm557, %v559, %v555
    %v561 = vmul.f32 1.0, %v560
    %v562 = vrcp.pop %v514
    %v563 = vmul.f32 %v514, %v562
    %v564 = vsub.f32 1.0, %v563
    %v565 = vmul.f32 %v562, %v564
    %v566 = vadd.f32 %v562, %v565
    %vm567 = vweird.f32 %v514
    %vm568 = vweird.f32 %v562
    %vm569 = vmor %vm567, %vm568
    %v570 = vsel %vm569, %v562, %v566
    %v571 = vand.u32 2147483647, %v514
    %vm572 = vcmp.eq.f32.partialorder %v571, 8.507059e+37
    %v573 = vand.u32 %v514, 2147483648
    %v574 = vor.u32 1.1754944e-38, %v573
    %v575 = vsel %vm572, %v574, %v570
    %v576 = vmul.f32 1.0, %v575
    %v577 = vrcp.pop %v515
    %v578 = vmul.f32 %v515, %v577
    %v579 = vsub.f32 1.0, %v578
    %v580 = vmul.f32 %v577, %v579
    %v581 = vadd.f32 %v577, %v580
    %vm582 = vweird.f32 %v515
    %vm583 = vweird.f32 %v577
    %vm584 = vmor %vm582, %vm583
    %v585 = vsel %vm584, %v577, %v581
    %v586 = vand.u32 2147483647, %v515
    %vm587 = vcmp.eq.f32.partialorder %v586, 8.507059e+37
    %v588 = vand.u32 %v515, 2147483648
    %v589 = vor.u32 1.1754944e-38, %v588
    %v590 = vsel %vm587, %v589, %v585
    %v591 = vmul.f32 1.0, %v590
    %v592 = vrcp.pop %v516
    %v593 = vmul.f32 %v516, %v592
    %v594 = vsub.f32 1.0, %v593
    %v595 = vmul.f32 %v592, %v594
    %v596 = vadd.f32 %v592, %v595
    %vm597 = vweird.f32 %v516
    %vm598 = vweird.f32 %v592
    %vm599 = vmor %vm597, %vm598
    %v600 = vsel %vm599, %v592, %v596
    %v601 = vand.u32 2147483647, %v516
    %vm602 = vcmp.eq.f32.partialorder %v601, 8.507059e+37
    %v603 = vand.u32 %v516, 2147483648
    %v604 = vor.u32 1.1754944e-38, %v603
    %v605 = vsel %vm602, %v604, %v600
    %v606 = vmul.f32 1.0, %v605
    %v607 = vtanh.pop %v488
    %v608 = vtanh.pop %v492
    %v611 = vrot.slane %v377, 7
    %v612 = vrot.slane %v378, 7
    %v615 = vmul.f32 %v546, %v611
    %v616 = vmul.f32 %v591, %v612
    %v617 = vmul.f32 %v531, %v607
    %v618 = vmul.f32 %v576, %v608
    %v619 = vadd.f32 %v615, %v617
    %v620 = vadd.f32 %v616, %v618
    %v621 = vtanh.pop %v619
    %v622 = vtanh.pop %v620
    %v623 = vmul.f32 %v561, %v621
    %v624 = vmul.f32 %v606, %v622
    %v627 = vrot.slane %v623, 1
    %v628 = vsel %vm386, %v624, %v627
    %630 = vmatpush.msra.mxu0 %v103
    %631 = vmatpush.msra.mxu0 %v99
    %632 = vmatpush.msra.mxu0 %v95
    %633 = vmatpush.msra.mxu0 %v91
    %634 = vmatpush.msra.mxu0 %v87
    %635 = vmatpush.msra.mxu0 %v83
    %636 = vmatpush.msra.mxu0 %v79
    %637 = vmatpush.msra.mxu0 %v75
    %638 = vmatpush.msra.mxu0 %v71
    %639 = vmatpush.msra.mxu0 %v67
    %640 = vmatpush.msra.mxu0 %v63
    %641 = vmatpush.msra.mxu0 %v59
    %642 = vmatpush.msra.mxu0 %v55
    %643 = vmatpush.msra.mxu0 %v51
    %644 = vmatpush.msra.mxu0 %v47
    %645 = vmatpush.msra.mxu0 %v43
    %646 = vmatmul.f32.gmra.mxu0 %v628
    %v647 = vpop.f32.mrf.mxu0
    %v648 = vadd.f32 0.0, %v647
    %649 = vdwg.mxu0
    %650 = vmatpush.msra.mxu0 %v104
    %651 = vmatpush.msra.mxu0 %v100
    %652 = vmatpush.msra.mxu0 %v96
    %653 = vmatpush.msra.mxu0 %v92
    %654 = vmatpush.msra.mxu0 %v88
    %655 = vmatpush.msra.mxu0 %v84
    %656 = vmatpush.msra.mxu0 %v80
    %657 = vmatpush.msra.mxu0 %v76
    %658 = vmatpush.msra.mxu0 %v72
    %659 = vmatpush.msra.mxu0 %v68
    %660 = vmatpush.msra.mxu0 %v64
    %661 = vmatpush.msra.mxu0 %v60
    %662 = vmatpush.msra.mxu0 %v56
    %663 = vmatpush.msra.mxu0 %v52
    %664 = vmatpush.msra.mxu0 %v48
    %665 = vmatpush.msra.mxu0 %v44
    %666 = vmatmul.f32.gmra.mxu0 %v628
    %v667 = vpop.f32.mrf.mxu0
    %v668 = vadd.f32 0.0, %v667
    %669 = vdwg.mxu0
    %670 = vmatpush.msra.mxu0 %v105
    %671 = vmatpush.msra.mxu0 %v101
    %672 = vmatpush.msra.mxu0 %v97
    %673 = vmatpush.msra.mxu0 %v93
    %674 = vmatpush.msra.mxu0 %v89
    %675 = vmatpush.msra.mxu0 %v85
    %676 = vmatpush.msra.mxu0 %v81
    %677 = vmatpush.msra.mxu0 %v77
    %678 = vmatpush.msra.mxu0 %v73
    %679 = vmatpush.msra.mxu0 %v69
    %680 = vmatpush.msra.mxu0 %v65
    %681 = vmatpush.msra.mxu0 %v61
    %682 = vmatpush.msra.mxu0 %v57
    %683 = vmatpush.msra.mxu0 %v53
    %684 = vmatpush.msra.mxu0 %v49
    %685 = vmatpush.msra.mxu0 %v45
    %686 = vmatmul.f32.gmra.mxu0 %v628
    %v687 = vpop.f32.mrf.mxu0
    %v688 = vadd.f32 0.0, %v687
    %689 = vdwg.mxu0
    %690 = vmatpush.msra.mxu0 %v106
    %691 = vmatpush.msra.mxu0 %v102
    %692 = vmatpush.msra.mxu0 %v98
    %693 = vmatpush.msra.mxu0 %v94
    %694 = vmatpush.msra.mxu0 %v90
    %695 = vmatpush.msra.mxu0 %v86
    %696 = vmatpush.msra.mxu0 %v82
    %697 = vmatpush.msra.mxu0 %v78
    %698 = vmatpush.msra.mxu0 %v74
    %699 = vmatpush.msra.mxu0 %v70
    %700 = vmatpush.msra.mxu0 %v66
    %701 = vmatpush.msra.mxu0 %v62
    %702 = vmatpush.msra.mxu0 %v58
    %703 = vmatpush.msra.mxu0 %v54
    %704 = vmatpush.msra.mxu0 %v50
    %705 = vmatpush.msra.mxu0 %v46
    %706 = vmatmul.f32.gmra.mxu0 %v628
    %v707 = vpop.f32.mrf.mxu0
    %v708 = vadd.f32 0.0, %v707
    %709 = vdwg.mxu0
    %v714 = vrot.slane %v648, 6
    %v715 = vrot.slane %v668, 6
    %v716 = vrot.slane %v688, 6
    %v717 = vrot.slane %v708, 6
    %v718 = vrot.slane %v648, 7
    %v719 = vrot.slane %v668, 7
    %v720 = vrot.slane %v688, 7
    %v721 = vrot.slane %v708, 7
    %v730 = vadd.f32 %v145, %v714
    %v731 = vadd.f32 %v146, %v715
    %v732 = vadd.f32 %v147, %v716
    %v733 = vadd.f32 %v148, %v717
    %v734 = vadd.f32 %v149, %v718
    %v735 = vadd.f32 %v150, %v719
    %v736 = vadd.f32 %v151, %v720
    %v737 = vadd.f32 %v152, %v721
    %v738 = vxor.u32 %v730, 2147483648
    %v739 = vxor.u32 %v731, 2147483648
    %v740 = vxor.u32 %v732, 2147483648
    %v741 = vxor.u32 %v734, 2147483648
    %v742 = vxor.u32 %v735, 2147483648
    %v743 = vxor.u32 %v736, 2147483648
    %v744 = vmul.f32 %v738, 1.442695
    %v745 = vpow.pop %v744
    %v746 = vmul.f32 %v739, 1.442695
    %v747 = vpow.pop %v746
    %v748 = vmul.f32 %v740, 1.442695
    %v749 = vpow.pop %v748
    %v750 = vmul.f32 %v741, 1.442695
    %v751 = vpow.pop %v750
    %v752 = vmul.f32 %v742, 1.442695
    %v753 = vpow.pop %v752
    %v754 = vmul.f32 %v743, 1.442695
    %v755 = vpow.pop %v754
    %v756 = vadd.f32 %v745, 1.0
    %v757 = vadd.f32 %v747, 1.0
    %v758 = vadd.f32 %v749, 1.0
    %v759 = vadd.f32 %v751, 1.0
    %v760 = vadd.f32 %v753, 1.0
    %v761 = vadd.f32 %v755, 1.0
    %v762 = vrcp.pop %v756
    %v763 = vmul.f32 %v756, %v762
    %v764 = vsub.f32 1.0, %v763
    %v765 = vmul.f32 %v762, %v764
    %v766 = vadd.f32 %v762, %v765
    %vm767 = vweird.f32 %v756
    %vm768 = vweird.f32 %v762
    %vm769 = vmor %vm767, %vm768
    %v770 = vsel %vm769, %v762, %v766
    %v771 = vand.u32 2147483647, %v756
    %vm772 = vcmp.eq.f32.partialorder %v771, 8.507059e+37
    %v773 = vand.u32 %v756, 2147483648
    %v774 = vor.u32 1.1754944e-38, %v773
    %v775 = vsel %vm772, %v774, %v770
    %v776 = vmul.f32 1.0, %v775
    %v777 = vrcp.pop %v757
    %v778 = vmul.f32 %v757, %v777
    %v779 = vsub.f32 1.0, %v778
    %v780 = vmul.f32 %v777, %v779
    %v781 = vadd.f32 %v777, %v780
    %vm782 = vweird.f32 %v757
    %vm783 = vweird.f32 %v777
    %vm784 = vmor %vm782, %vm783
    %v785 = vsel %vm784, %v777, %v781
    %v786 = vand.u32 2147483647, %v757
    %vm787 = vcmp.eq.f32.partialorder %v786, 8.507059e+37
    %v788 = vand.u32 %v757, 2147483648
    %v789 = vor.u32 1.1754944e-38, %v788
    %v790 = vsel %vm787, %v789, %v785
    %v791 = vmul.f32 1.0, %v790
    %v792 = vrcp.pop %v758
    %v793 = vmul.f32 %v758, %v792
    %v794 = vsub.f32 1.0, %v793
    %v795 = vmul.f32 %v792, %v794
    %v796 = vadd.f32 %v792, %v795
    %vm797 = vweird.f32 %v758
    %vm798 = vweird.f32 %v792
    %vm799 = vmor %vm797, %vm798
    %v800 = vsel %vm799, %v792, %v796
    %v801 = vand.u32 2147483647, %v758
    %vm802 = vcmp.eq.f32.partialorder %v801, 8.507059e+37
    %v803 = vand.u32 %v758, 2147483648
    %v804 = vor.u32 1.1754944e-38, %v803
    %v805 = vsel %vm802, %v804, %v800
    %v806 = vmul.f32 1.0, %v805
    %v807 = vrcp.pop %v759
    %v808 = vmul.f32 %v759, %v807
    %v809 = vsub.f32 1.0, %v808
    %v810 = vmul.f32 %v807, %v809
    %v811 = vadd.f32 %v807, %v810
    %vm812 = vweird.f32 %v759
    %vm813 = vweird.f32 %v807
    %vm814 = vmor %vm812, %vm813
    %v815 = vsel %vm814, %v807, %v811
    %v816 = vand.u32 2147483647, %v759
    %vm817 = vcmp.eq.f32.partialorder %v816, 8.507059e+37
    %v818 = vand.u32 %v759, 2147483648
    %v819 = vor.u32 1.1754944e-38, %v818
    %v820 = vsel %vm817, %v819, %v815
    %v821 = vmul.f32 1.0, %v820
    %v822 = vrcp.pop %v760
    %v823 = vmul.f32 %v760, %v822
    %v824 = vsub.f32 1.0, %v823
    %v825 = vmul.f32 %v822, %v824
    %v826 = vadd.f32 %v822, %v825
    %vm827 = vweird.f32 %v760
    %vm828 = vweird.f32 %v822
    %vm829 = vmor %vm827, %vm828
    %v830 = vsel %vm829, %v822, %v826
    %v831 = vand.u32 2147483647, %v760
    %vm832 = vcmp.eq.f32.partialorder %v831, 8.507059e+37
    %v833 = vand.u32 %v760, 2147483648
    %v834 = vor.u32 1.1754944e-38, %v833
    %v835 = vsel %vm832, %v834, %v830
    %v836 = vmul.f32 1.0, %v835
    %v837 = vrcp.pop %v761
    %v838 = vmul.f32 %v761, %v837
    %v839 = vsub.f32 1.0, %v838
    %v840 = vmul.f32 %v837, %v839
    %v841 = vadd.f32 %v837, %v840
    %vm842 = vweird.f32 %v761
    %vm843 = vweird.f32 %v837
    %vm844 = vmor %vm842, %vm843
    %v845 = vsel %vm844, %v837, %v841
    %v846 = vand.u32 2147483647, %v761
    %vm847 = vcmp.eq.f32.partialorder %v846, 8.507059e+37
    %v848 = vand.u32 %v761, 2147483648
    %v849 = vor.u32 1.1754944e-38, %v848
    %v850 = vsel %vm847, %v849, %v845
    %v851 = vmul.f32 1.0, %v850
    %v852 = vtanh.pop %v733
    %v853 = vtanh.pop %v737
    %v856 = vrot.slane %v619, 7
    %v857 = vrot.slane %v620, 7
    %v860 = vmul.f32 %v791, %v856
    %v861 = vmul.f32 %v836, %v857
    %v862 = vmul.f32 %v776, %v852
    %v863 = vmul.f32 %v821, %v853
    %v864 = vadd.f32 %v860, %v862
    %v865 = vadd.f32 %v861, %v863
    %v866 = vtanh.pop %v864
    %v867 = vtanh.pop %v865
    %v868 = vmul.f32 %v806, %v866
    %v869 = vmul.f32 %v851, %v867
    %v872 = vrot.slane %v868, 2
    %v873 = vrot.slane %v869, 1
    %v874 = vsel %vm386, %v873, %v872
    %876 = vmatpush.msra.mxu0 %v103
    %877 = vmatpush.msra.mxu0 %v99
    %878 = vmatpush.msra.mxu0 %v95
    %879 = vmatpush.msra.mxu0 %v91
    %880 = vmatpush.msra.mxu0 %v87
    %881 = vmatpush.msra.mxu0 %v83
    %882 = vmatpush.msra.mxu0 %v79
    %883 = vmatpush.msra.mxu0 %v75
    %884 = vmatpush.msra.mxu0 %v71
    %885 = vmatpush.msra.mxu0 %v67
    %886 = vmatpush.msra.mxu0 %v63
    %887 = vmatpush.msra.mxu0 %v59
    %888 = vmatpush.msra.mxu0 %v55
    %889 = vmatpush.msra.mxu0 %v51
    %890 = vmatpush.msra.mxu0 %v47
    %891 = vmatpush.msra.mxu0 %v43
    %892 = vmatmul.f32.gmra.mxu0 %v874
    %v893 = vpop.f32.mrf.mxu0
    %v894 = vadd.f32 0.0, %v893
    %895 = vdwg.mxu0
    %896 = vmatpush.msra.mxu0 %v104
    %897 = vmatpush.msra.mxu0 %v100
    %898 = vmatpush.msra.mxu0 %v96
    %899 = vmatpush.msra.mxu0 %v92
    %900 = vmatpush.msra.mxu0 %v88
    %901 = vmatpush.msra.mxu0 %v84
    %902 = vmatpush.msra.mxu0 %v80
    %903 = vmatpush.msra.mxu0 %v76
    %904 = vmatpush.msra.mxu0 %v72
    %905 = vmatpush.msra.mxu0 %v68
    %906 = vmatpush.msra.mxu0 %v64
    %907 = vmatpush.msra.mxu0 %v60
    %908 = vmatpush.msra.mxu0 %v56
    %909 = vmatpush.msra.mxu0 %v52
    %910 = vmatpush.msra.mxu0 %v48
    %911 = vmatpush.msra.mxu0 %v44
    %912 = vmatmul.f32.gmra.mxu0 %v874
    %v913 = vpop.f32.mrf.mxu0
    %v914 = vadd.f32 0.0, %v913
    %915 = vdwg.mxu0
    %916 = vmatpush.msra.mxu0 %v105
    %917 = vmatpush.msra.mxu0 %v101
    %918 = vmatpush.msra.mxu0 %v97
    %919 = vmatpush.msra.mxu0 %v93
    %920 = vmatpush.msra.mxu0 %v89
    %921 = vmatpush.msra.mxu0 %v85
    %922 = vmatpush.msra.mxu0 %v81
    %923 = vmatpush.msra.mxu0 %v77
    %924 = vmatpush.msra.mxu0 %v73
    %925 = vmatpush.msra.mxu0 %v69
    %926 = vmatpush.msra.mxu0 %v65
    %927 = vmatpush.msra.mxu0 %v61
    %928 = vmatpush.msra.mxu0 %v57
    %929 = vmatpush.msra.mxu0 %v53
    %930 = vmatpush.msra.mxu0 %v49
    %931 = vmatpush.msra.mxu0 %v45
    %932 = vmatmul.f32.gmra.mxu0 %v874
    %v933 = vpop.f32.mrf.mxu0
    %v934 = vadd.f32 0.0, %v933
    %935 = vdwg.mxu0
    %936 = vmatpush.msra.mxu0 %v106
    %937 = vmatpush.msra.mxu0 %v102
    %938 = vmatpush.msra.mxu0 %v98
    %939 = vmatpush.msra.mxu0 %v94
    %940 = vmatpush.msra.mxu0 %v90
    %941 = vmatpush.msra.mxu0 %v86
    %942 = vmatpush.msra.mxu0 %v82
    %943 = vmatpush.msra.mxu0 %v78
    %944 = vmatpush.msra.mxu0 %v74
    %945 = vmatpush.msra.mxu0 %v70
    %946 = vmatpush.msra.mxu0 %v66
    %947 = vmatpush.msra.mxu0 %v62
    %948 = vmatpush.msra.mxu0 %v58
    %949 = vmatpush.msra.mxu0 %v54
    %950 = vmatpush.msra.mxu0 %v50
    %951 = vmatpush.msra.mxu0 %v46
    %952 = vmatmul.f32.gmra.mxu0 %v874
    %v953 = vpop.f32.mrf.mxu0
    %v954 = vadd.f32 0.0, %v953
    %955 = vdwg.mxu0
    %v960 = vrot.slane %v894, 5
    %v961 = vrot.slane %v914, 5
    %v962 = vrot.slane %v934, 5
    %v963 = vrot.slane %v954, 5
    %v964 = vrot.slane %v894, 6
    %v965 = vrot.slane %v914, 6
    %v966 = vrot.slane %v934, 6
    %v967 = vrot.slane %v954, 6
    %v976 = vadd.f32 %v145, %v960
    %v977 = vadd.f32 %v146, %v961
    %v978 = vadd.f32 %v147, %v962
    %v979 = vadd.f32 %v148, %v963
    %v980 = vadd.f32 %v149, %v964
    %v981 = vadd.f32 %v150, %v965
    %v982 = vadd.f32 %v151, %v966
    %v983 = vadd.f32 %v152, %v967
    %v984 = vxor.u32 %v976, 2147483648
    %v985 = vxor.u32 %v977, 2147483648
    %v986 = vxor.u32 %v978, 2147483648
    %v987 = vxor.u32 %v980, 2147483648
    %v988 = vxor.u32 %v981, 2147483648
    %v989 = vxor.u32 %v982, 2147483648
    %v990 = vmul.f32 %v984, 1.442695
    %v991 = vpow.pop %v990
    %v992 = vmul.f32 %v985, 1.442695
    %v993 = vpow.pop %v992
    %v994 = vmul.f32 %v986, 1.442695
    %v995 = vpow.pop %v994
    %v996 = vmul.f32 %v987, 1.442695
    %v997 = vpow.pop %v996
    %v998 = vmul.f32 %v988, 1.442695
    %v999 = vpow.pop %v998
    %v1000 = vmul.f32 %v989, 1.442695
    %v1001 = vpow.pop %v1000
    %v1002 = vadd.f32 %v991, 1.0
    %v1003 = vadd.f32 %v993, 1.0
    %v1004 = vadd.f32 %v995, 1.0
    %v1005 = vadd.f32 %v997, 1.0
    %v1006 = vadd.f32 %v999, 1.0
    %v1007 = vadd.f32 %v1001, 1.0
    %v1008 = vrcp.pop %v1002
    %v1009 = vmul.f32 %v1002, %v1008
    %v1010 = vsub.f32 1.0, %v1009
    %v1011 = vmul.f32 %v1008, %v1010
    %v1012 = vadd.f32 %v1008, %v1011
    %vm1013 = vweird.f32 %v1002
    %vm1014 = vweird.f32 %v1008
    %vm1015 = vmor %vm1013, %vm1014
    %v1016 = vsel %vm1015, %v1008, %v1012
    %v1017 = vand.u32 2147483647, %v1002
    %vm1018 = vcmp.eq.f32.partialorder %v1017, 8.507059e+37
    %v1019 = vand.u32 %v1002, 2147483648
    %v1020 = vor.u32 1.1754944e-38, %v1019
    %v1021 = vsel %vm1018, %v1020, %v1016
    %v1022 = vmul.f32 1.0, %v1021
    %v1023 = vrcp.pop %v1003
    %v1024 = vmul.f32 %v1003, %v1023
    %v1025 = vsub.f32 1.0, %v1024
    %v1026 = vmul.f32 %v1023, %v1025
    %v1027 = vadd.f32 %v1023, %v1026
    %vm1028 = vweird.f32 %v1003
    %vm1029 = vweird.f32 %v1023
    %vm1030 = vmor %vm1028, %vm1029
    %v1031 = vsel %vm1030, %v1023, %v1027
    %v1032 = vand.u32 2147483647, %v1003
    %vm1033 = vcmp.eq.f32.partialorder %v1032, 8.507059e+37
    %v1034 = vand.u32 %v1003, 2147483648
    %v1035 = vor.u32 1.1754944e-38, %v1034
    %v1036 = vsel %vm1033, %v1035, %v1031
    %v1037 = vmul.f32 1.0, %v1036
    %v1038 = vrcp.pop %v1004
    %v1039 = vmul.f32 %v1004, %v1038
    %v1040 = vsub.f32 1.0, %v1039
    %v1041 = vmul.f32 %v1038, %v1040
    %v1042 = vadd.f32 %v1038, %v1041
    %vm1043 = vweird.f32 %v1004
    %vm1044 = vweird.f32 %v1038
    %vm1045 = vmor %vm1043, %vm1044
    %v1046 = vsel %vm1045, %v1038, %v1042
    %v1047 = vand.u32 2147483647, %v1004
    %vm1048 = vcmp.eq.f32.partialorder %v1047, 8.507059e+37
    %v1049 = vand.u32 %v1004, 2147483648
    %v1050 = vor.u32 1.1754944e-38, %v1049
    %v1051 = vsel %vm1048, %v1050, %v1046
    %v1052 = vmul.f32 1.0, %v1051
    %v1053 = vrcp.pop %v1005
    %v1054 = vmul.f32 %v1005, %v1053
    %v1055 = vsub.f32 1.0, %v1054
    %v1056 = vmul.f32 %v1053, %v1055
    %v1057 = vadd.f32 %v1053, %v1056
    %vm1058 = vweird.f32 %v1005
    %vm1059 = vweird.f32 %v1053
    %vm1060 = vmor %vm1058, %vm1059
    %v1061 = vsel %vm1060, %v1053, %v1057
    %v1062 = vand.u32 2147483647, %v1005
    %vm1063 = vcmp.eq.f32.partialorder %v1062, 8.507059e+37
    %v1064 = vand.u32 %v1005, 2147483648
    %v1065 = vor.u32 1.1754944e-38, %v1064
    %v1066 = vsel %vm1063, %v1065, %v1061
    %v1067 = vmul.f32 1.0, %v1066
    %v1068 = vrcp.pop %v1006
    %v1069 = vmul.f32 %v1006, %v1068
    %v1070 = vsub.f32 1.0, %v1069
    %v1071 = vmul.f32 %v1068, %v1070
    %v1072 = vadd.f32 %v1068, %v1071
    %vm1073 = vweird.f32 %v1006
    %vm1074 = vweird.f32 %v1068
    %vm1075 = vmor %vm1073, %vm1074
    %v1076 = vsel %vm1075, %v1068, %v1072
    %v1077 = vand.u32 2147483647, %v1006
    %vm1078 = vcmp.eq.f32.partialorder %v1077, 8.507059e+37
    %v1079 = vand.u32 %v1006, 2147483648
    %v1080 = vor.u32 1.1754944e-38, %v1079
    %v1081 = vsel %vm1078, %v1080, %v1076
    %v1082 = vmul.f32 1.0, %v1081
    %v1083 = vrcp.pop %v1007
    %v1084 = vmul.f32 %v1007, %v1083
    %v1085 = vsub.f32 1.0, %v1084
    %v1086 = vmul.f32 %v1083, %v1085
    %v1087 = vadd.f32 %v1083, %v1086
    %vm1088 = vweird.f32 %v1007
    %vm1089 = vweird.f32 %v1083
    %vm1090 = vmor %vm1088, %vm1089
    %v1091 = vsel %vm1090, %v1083, %v1087
    %v1092 = vand.u32 2147483647, %v1007
    %vm1093 = vcmp.eq.f32.partialorder %v1092, 8.507059e+37
    %v1094 = vand.u32 %v1007, 2147483648
    %v1095 = vor.u32 1.1754944e-38, %v1094
    %v1096 = vsel %vm1093, %v1095, %v1091
    %v1097 = vmul.f32 1.0, %v1096
    %v1098 = vtanh.pop %v979
    %v1099 = vtanh.pop %v983
    %v1102 = vrot.slane %v864, 7
    %v1103 = vrot.slane %v865, 7
    %v1106 = vmul.f32 %v1037, %v1102
    %v1107 = vmul.f32 %v1082, %v1103
    %v1108 = vmul.f32 %v1022, %v1098
    %v1109 = vmul.f32 %v1067, %v1099
    %v1110 = vadd.f32 %v1106, %v1108
    %v1111 = vadd.f32 %v1107, %v1109
    %v1112 = vtanh.pop %v1110
    %v1113 = vtanh.pop %v1111
    %v1114 = vmul.f32 %v1052, %v1112
    %v1115 = vmul.f32 %v1097, %v1113
    %v1118 = vrot.slane %v1114, 3
    %v1119 = vrot.slane %v1115, 2
    %v1120 = vsel %vm386, %v1119, %v1118
    %1122 = vmatpush.msra.mxu0 %v103
    %1123 = vmatpush.msra.mxu0 %v99
    %1124 = vmatpush.msra.mxu0 %v95
    %1125 = vmatpush.msra.mxu0 %v91
    %1126 = vmatpush.msra.mxu0 %v87
    %1127 = vmatpush.msra.mxu0 %v83
    %1128 = vmatpush.msra.mxu0 %v79
    %1129 = vmatpush.msra.mxu0 %v75
    %1130 = vmatpush.msra.mxu0 %v71
    %1131 = vmatpush.msra.mxu0 %v67
    %1132 = vmatpush.msra.mxu0 %v63
    %1133 = vmatpush.msra.mxu0 %v59
    %1134 = vmatpush.msra.mxu0 %v55
    %1135 = vmatpush.msra.mxu0 %v51
    %1136 = vmatpush.msra.mxu0 %v47
    %1137 = vmatpush.msra.mxu0 %v43
    %1138 = vmatmul.f32.gmra.mxu0 %v1120
    %v1139 = vpop.f32.mrf.mxu0
    %v1140 = vadd.f32 0.0, %v1139
    %1141 = vdwg.mxu0
    %1142 = vmatpush.msra.mxu0 %v104
    %1143 = vmatpush.msra.mxu0 %v100
    %1144 = vmatpush.msra.mxu0 %v96
    %1145 = vmatpush.msra.mxu0 %v92
    %1146 = vmatpush.msra.mxu0 %v88
    %1147 = vmatpush.msra.mxu0 %v84
    %1148 = vmatpush.msra.mxu0 %v80
    %1149 = vmatpush.msra.mxu0 %v76
    %1150 = vmatpush.msra.mxu0 %v72
    %1151 = vmatpush.msra.mxu0 %v68
    %1152 = vmatpush.msra.mxu0 %v64
    %1153 = vmatpush.msra.mxu0 %v60
    %1154 = vmatpush.msra.mxu0 %v56
    %1155 = vmatpush.msra.mxu0 %v52
    %1156 = vmatpush.msra.mxu0 %v48
    %1157 = vmatpush.msra.mxu0 %v44
    %1158 = vmatmul.f32.gmra.mxu0 %v1120
    %v1159 = vpop.f32.mrf.mxu0
    %v1160 = vadd.f32 0.0, %v1159
    %1161 = vdwg.mxu0
    %1162 = vmatpush.msra.mxu0 %v105
    %1163 = vmatpush.msra.mxu0 %v101
    %1164 = vmatpush.msra.mxu0 %v97
    %1165 = vmatpush.msra.mxu0 %v93
    %1166 = vmatpush.msra.mxu0 %v89
    %1167 = vmatpush.msra.mxu0 %v85
    %1168 = vmatpush.msra.mxu0 %v81
    %1169 = vmatpush.msra.mxu0 %v77
    %1170 = vmatpush.msra.mxu0 %v73
    %1171 = vmatpush.msra.mxu0 %v69
    %1172 = vmatpush.msra.mxu0 %v65
    %1173 = vmatpush.msra.mxu0 %v61
    %1174 = vmatpush.msra.mxu0 %v57
    %1175 = vmatpush.msra.mxu0 %v53
    %1176 = vmatpush.msra.mxu0 %v49
    %1177 = vmatpush.msra.mxu0 %v45
    %1178 = vmatmul.f32.gmra.mxu0 %v1120
    %v1179 = vpop.f32.mrf.mxu0
    %v1180 = vadd.f32 0.0, %v1179
    %1181 = vdwg.mxu0
    %1182 = vmatpush.msra.mxu0 %v106
    %1183 = vmatpush.msra.mxu0 %v102
    %1184 = vmatpush.msra.mxu0 %v98
    %1185 = vmatpush.msra.mxu0 %v94
    %1186 = vmatpush.msra.mxu0 %v90
    %1187 = vmatpush.msra.mxu0 %v86
    %1188 = vmatpush.msra.mxu0 %v82
    %1189 = vmatpush.msra.mxu0 %v78
    %1190 = vmatpush.msra.mxu0 %v74
    %1191 = vmatpush.msra.mxu0 %v70
    %1192 = vmatpush.msra.mxu0 %v66
    %1193 = vmatpush.msra.mxu0 %v62
    %1194 = vmatpush.msra.mxu0 %v58
    %1195 = vmatpush.msra.mxu0 %v54
    %1196 = vmatpush.msra.mxu0 %v50
    %1197 = vmatpush.msra.mxu0 %v46
    %1198 = vmatmul.f32.gmra.mxu0 %v1120
    %v1199 = vpop.f32.mrf.mxu0
    %v1200 = vadd.f32 0.0, %v1199
    %1201 = vdwg.mxu0
    %v1206 = vrot.slane %v1140, 4
    %v1207 = vrot.slane %v1160, 4
    %v1208 = vrot.slane %v1180, 4
    %v1209 = vrot.slane %v1200, 4
    %v1210 = vrot.slane %v1140, 5
    %v1211 = vrot.slane %v1160, 5
    %v1212 = vrot.slane %v1180, 5
    %v1213 = vrot.slane %v1200, 5
    %v1222 = vadd.f32 %v145, %v1206
    %v1223 = vadd.f32 %v146, %v1207
    %v1224 = vadd.f32 %v147, %v1208
    %v1225 = vadd.f32 %v148, %v1209
    %v1226 = vadd.f32 %v149, %v1210
    %v1227 = vadd.f32 %v150, %v1211
    %v1228 = vadd.f32 %v151, %v1212
    %v1229 = vadd.f32 %v152, %v1213
    %v1230 = vxor.u32 %v1222, 2147483648
    %v1231 = vxor.u32 %v1223, 2147483648
    %v1232 = vxor.u32 %v1224, 2147483648
    %v1233 = vxor.u32 %v1226, 2147483648
    %v1234 = vxor.u32 %v1227, 2147483648
    %v1235 = vxor.u32 %v1228, 2147483648
    %v1236 = vmul.f32 %v1230, 1.442695
    %v1237 = vpow.pop %v1236
    %v1238 = vmul.f32 %v1231, 1.442695
    %v1239 = vpow.pop %v1238
    %v1240 = vmul.f32 %v1232, 1.442695
    %v1241 = vpow.pop %v1240
    %v1242 = vmul.f32 %v1233, 1.442695
    %v1243 = vpow.pop %v1242
    %v1244 = vmul.f32 %v1234, 1.442695
    %v1245 = vpow.pop %v1244
    %v1246 = vmul.f32 %v1235, 1.442695
    %v1247 = vpow.pop %v1246
    %v1248 = vadd.f32 %v1237, 1.0
    %v1249 = vadd.f32 %v1239, 1.0
    %v1250 = vadd.f32 %v1241, 1.0
    %v1251 = vadd.f32 %v1243, 1.0
    %v1252 = vadd.f32 %v1245, 1.0
    %v1253 = vadd.f32 %v1247, 1.0
    %v1254 = vrcp.pop %v1248
    %v1255 = vmul.f32 %v1248, %v1254
    %v1256 = vsub.f32 1.0, %v1255
    %v1257 = vmul.f32 %v1254, %v1256
    %v1258 = vadd.f32 %v1254, %v1257
    %vm1259 = vweird.f32 %v1248
    %vm1260 = vweird.f32 %v1254
    %vm1261 = vmor %vm1259, %vm1260
    %v1262 = vsel %vm1261, %v1254, %v1258
    %v1263 = vand.u32 2147483647, %v1248
    %vm1264 = vcmp.eq.f32.partialorder %v1263, 8.507059e+37
    %v1265 = vand.u32 %v1248, 2147483648
    %v1266 = vor.u32 1.1754944e-38, %v1265
    %v1267 = vsel %vm1264, %v1266, %v1262
    %v1268 = vmul.f32 1.0, %v1267
    %v1269 = vrcp.pop %v1249
    %v1270 = vmul.f32 %v1249, %v1269
    %v1271 = vsub.f32 1.0, %v1270
    %v1272 = vmul.f32 %v1269, %v1271
    %v1273 = vadd.f32 %v1269, %v1272
    %vm1274 = vweird.f32 %v1249
    %vm1275 = vweird.f32 %v1269
    %vm1276 = vmor %vm1274, %vm1275
    %v1277 = vsel %vm1276, %v1269, %v1273
    %v1278 = vand.u32 2147483647, %v1249
    %vm1279 = vcmp.eq.f32.partialorder %v1278, 8.507059e+37
    %v1280 = vand.u32 %v1249, 2147483648
    %v1281 = vor.u32 1.1754944e-38, %v1280
    %v1282 = vsel %vm1279, %v1281, %v1277
    %v1283 = vmul.f32 1.0, %v1282
    %v1284 = vrcp.pop %v1250
    %v1285 = vmul.f32 %v1250, %v1284
    %v1286 = vsub.f32 1.0, %v1285
    %v1287 = vmul.f32 %v1284, %v1286
    %v1288 = vadd.f32 %v1284, %v1287
    %vm1289 = vweird.f32 %v1250
    %vm1290 = vweird.f32 %v1284
    %vm1291 = vmor %vm1289, %vm1290
    %v1292 = vsel %vm1291, %v1284, %v1288
    %v1293 = vand.u32 2147483647, %v1250
    %vm1294 = vcmp.eq.f32.partialorder %v1293, 8.507059e+37
    %v1295 = vand.u32 %v1250, 2147483648
    %v1296 = vor.u32 1.1754944e-38, %v1295
    %v1297 = vsel %vm1294, %v1296, %v1292
    %v1298 = vmul.f32 1.0, %v1297
    %v1299 = vrcp.pop %v1251
    %v1300 = vmul.f32 %v1251, %v1299
    %v1301 = vsub.f32 1.0, %v1300
    %v1302 = vmul.f32 %v1299, %v1301
    %v1303 = vadd.f32 %v1299, %v1302
    %vm1304 = vweird.f32 %v1251
    %vm1305 = vweird.f32 %v1299
    %vm1306 = vmor %vm1304, %vm1305
    %v1307 = vsel %vm1306, %v1299, %v1303
    %v1308 = vand.u32 2147483647, %v1251
    %vm1309 = vcmp.eq.f32.partialorder %v1308, 8.507059e+37
    %v1310 = vand.u32 %v1251, 2147483648
    %v1311 = vor.u32 1.1754944e-38, %v1310
    %v1312 = vsel %vm1309, %v1311, %v1307
    %v1313 = vmul.f32 1.0, %v1312
    %v1314 = vrcp.pop %v1252
    %v1315 = vmul.f32 %v1252, %v1314
    %v1316 = vsub.f32 1.0, %v1315
    %v1317 = vmul.f32 %v1314, %v1316
    %v1318 = vadd.f32 %v1314, %v1317
    %vm1319 = vweird.f32 %v1252
    %vm1320 = vweird.f32 %v1314
    %vm1321 = vmor %vm1319, %vm1320
    %v1322 = vsel %vm1321, %v1314, %v1318
    %v1323 = vand.u32 2147483647, %v1252
    %vm1324 = vcmp.eq.f32.partialorder %v1323, 8.507059e+37
    %v1325 = vand.u32 %v1252, 2147483648
    %v1326 = vor.u32 1.1754944e-38, %v1325
    %v1327 = vsel %vm1324, %v1326, %v1322
    %v1328 = vmul.f32 1.0, %v1327
    %v1329 = vrcp.pop %v1253
    %v1330 = vmul.f32 %v1253, %v1329
    %v1331 = vsub.f32 1.0, %v1330
    %v1332 = vmul.f32 %v1329, %v1331
    %v1333 = vadd.f32 %v1329, %v1332
    %vm1334 = vweird.f32 %v1253
    %vm1335 = vweird.f32 %v1329
    %vm1336 = vmor %vm1334, %vm1335
    %v1337 = vsel %vm1336, %v1329, %v1333
    %v1338 = vand.u32 2147483647, %v1253
    %vm1339 = vcmp.eq.f32.partialorder %v1338, 8.507059e+37
    %v1340 = vand.u32 %v1253, 2147483648
    %v1341 = vor.u32 1.1754944e-38, %v1340
    %v1342 = vsel %vm1339, %v1341, %v1337
    %v1343 = vmul.f32 1.0, %v1342
    %v1344 = vtanh.pop %v1225
    %v1345 = vtanh.pop %v1229
    %v1348 = vrot.slane %v1110, 7
    %v1349 = vrot.slane %v1111, 7
    %v1352 = vmul.f32 %v1283, %v1348
    %v1353 = vmul.f32 %v1328, %v1349
    %v1354 = vmul.f32 %v1268, %v1344
    %v1355 = vmul.f32 %v1313, %v1345
    %v1356 = vadd.f32 %v1352, %v1354
    %v1357 = vadd.f32 %v1353, %v1355
    %v1358 = vtanh.pop %v1356
    %v1359 = vtanh.pop %v1357
    %v1360 = vmul.f32 %v1298, %v1358
    %v1361 = vmul.f32 %v1343, %v1359
    %v1364 = vrot.slane %v1360, 4
    %v1365 = vrot.slane %v1361, 3
    %v1366 = vsel %vm386, %v1365, %v1364
    %1368 = vmatpush.msra.mxu0 %v103
    %1369 = vmatpush.msra.mxu0 %v99
    %1370 = vmatpush.msra.mxu0 %v95
    %1371 = vmatpush.msra.mxu0 %v91
    %1372 = vmatpush.msra.mxu0 %v87
    %1373 = vmatpush.msra.mxu0 %v83
    %1374 = vmatpush.msra.mxu0 %v79
    %1375 = vmatpush.msra.mxu0 %v75
    %1376 = vmatpush.msra.mxu0 %v71
    %1377 = vmatpush.msra.mxu0 %v67
    %1378 = vmatpush.msra.mxu0 %v63
    %1379 = vmatpush.msra.mxu0 %v59
    %1380 = vmatpush.msra.mxu0 %v55
    %1381 = vmatpush.msra.mxu0 %v51
    %1382 = vmatpush.msra.mxu0 %v47
    %1383 = vmatpush.msra.mxu0 %v43
    %1384 = vmatmul.f32.gmra.mxu0 %v1366
    %v1385 = vpop.f32.mrf.mxu0
    %v1386 = vadd.f32 0.0, %v1385
    %1387 = vdwg.mxu0
    %1388 = vmatpush.msra.mxu0 %v104
    %1389 = vmatpush.msra.mxu0 %v100
    %1390 = vmatpush.msra.mxu0 %v96
    %1391 = vmatpush.msra.mxu0 %v92
    %1392 = vmatpush.msra.mxu0 %v88
    %1393 = vmatpush.msra.mxu0 %v84
    %1394 = vmatpush.msra.mxu0 %v80
    %1395 = vmatpush.msra.mxu0 %v76
    %1396 = vmatpush.msra.mxu0 %v72
    %1397 = vmatpush.msra.mxu0 %v68
    %1398 = vmatpush.msra.mxu0 %v64
    %1399 = vmatpush.msra.mxu0 %v60
    %1400 = vmatpush.msra.mxu0 %v56
    %1401 = vmatpush.msra.mxu0 %v52
    %1402 = vmatpush.msra.mxu0 %v48
    %1403 = vmatpush.msra.mxu0 %v44
    %1404 = vmatmul.f32.gmra.mxu0 %v1366
    %v1405 = vpop.f32.mrf.mxu0
    %v1406 = vadd.f32 0.0, %v1405
    %1407 = vdwg.mxu0
    %1408 = vmatpush.msra.mxu0 %v105
    %1409 = vmatpush.msra.mxu0 %v101
    %1410 = vmatpush.msra.mxu0 %v97
    %1411 = vmatpush.msra.mxu0 %v93
    %1412 = vmatpush.msra.mxu0 %v89
    %1413 = vmatpush.msra.mxu0 %v85
    %1414 = vmatpush.msra.mxu0 %v81
    %1415 = vmatpush.msra.mxu0 %v77
    %1416 = vmatpush.msra.mxu0 %v73
    %1417 = vmatpush.msra.mxu0 %v69
    %1418 = vmatpush.msra.mxu0 %v65
    %1419 = vmatpush.msra.mxu0 %v61
    %1420 = vmatpush.msra.mxu0 %v57
    %1421 = vmatpush.msra.mxu0 %v53
    %1422 = vmatpush.msra.mxu0 %v49
    %1423 = vmatpush.msra.mxu0 %v45
    %1424 = vmatmul.f32.gmra.mxu0 %v1366
    %v1425 = vpop.f32.mrf.mxu0
    %v1426 = vadd.f32 0.0, %v1425
    %1427 = vdwg.mxu0
    %1428 = vmatpush.msra.mxu0 %v106
    %1429 = vmatpush.msra.mxu0 %v102
    %1430 = vmatpush.msra.mxu0 %v98
    %1431 = vmatpush.msra.mxu0 %v94
    %1432 = vmatpush.msra.mxu0 %v90
    %1433 = vmatpush.msra.mxu0 %v86
    %1434 = vmatpush.msra.mxu0 %v82
    %1435 = vmatpush.msra.mxu0 %v78
    %1436 = vmatpush.msra.mxu0 %v74
    %1437 = vmatpush.msra.mxu0 %v70
    %1438 = vmatpush.msra.mxu0 %v66
    %1439 = vmatpush.msra.mxu0 %v62
    %1440 = vmatpush.msra.mxu0 %v58
    %1441 = vmatpush.msra.mxu0 %v54
    %1442 = vmatpush.msra.mxu0 %v50
    %1443 = vmatpush.msra.mxu0 %v46
    %1444 = vmatmul.f32.gmra.mxu0 %v1366
    %v1445 = vpop.f32.mrf.mxu0
    %v1446 = vadd.f32 0.0, %v1445
    %1447 = vdwg.mxu0
    %v1452 = vrot.slane %v1386, 3
    %v1453 = vrot.slane %v1406, 3
    %v1454 = vrot.slane %v1426, 3
    %v1455 = vrot.slane %v1446, 3
    %v1456 = vrot.slane %v1386, 4
    %v1457 = vrot.slane %v1406, 4
    %v1458 = vrot.slane %v1426, 4
    %v1459 = vrot.slane %v1446, 4
    %v1468 = vadd.f32 %v145, %v1452
    %v1469 = vadd.f32 %v146, %v1453
    %v1470 = vadd.f32 %v147, %v1454
    %v1471 = vadd.f32 %v148, %v1455
    %v1472 = vadd.f32 %v149, %v1456
    %v1473 = vadd.f32 %v150, %v1457
    %v1474 = vadd.f32 %v151, %v1458
    %v1475 = vadd.f32 %v152, %v1459
    %v1476 = vxor.u32 %v1468, 2147483648
    %v1477 = vxor.u32 %v1469, 2147483648
    %v1478 = vxor.u32 %v1470, 2147483648
    %v1479 = vxor.u32 %v1472, 2147483648
    %v1480 = vxor.u32 %v1473, 2147483648
    %v1481 = vxor.u32 %v1474, 2147483648
    %v1482 = vmul.f32 %v1476, 1.442695
    %v1483 = vpow.pop %v1482
    %v1484 = vmul.f32 %v1477, 1.442695
    %v1485 = vpow.pop %v1484
    %v1486 = vmul.f32 %v1478, 1.442695
    %v1487 = vpow.pop %v1486
    %v1488 = vmul.f32 %v1479, 1.442695
    %v1489 = vpow.pop %v1488
    %v1490 = vmul.f32 %v1480, 1.442695
    %v1491 = vpow.pop %v1490
    %v1492 = vmul.f32 %v1481, 1.442695
    %v1493 = vpow.pop %v1492
    %v1494 = vadd.f32 %v1483, 1.0
    %v1495 = vadd.f32 %v1485, 1.0
    %v1496 = vadd.f32 %v1487, 1.0
    %v1497 = vadd.f32 %v1489, 1.0
    %v1498 = vadd.f32 %v1491, 1.0
    %v1499 = vadd.f32 %v1493, 1.0
    %v1500 = vrcp.pop %v1494
    %v1501 = vmul.f32 %v1494, %v1500
    %v1502 = vsub.f32 1.0, %v1501
    %v1503 = vmul.f32 %v1500, %v1502
    %v1504 = vadd.f32 %v1500, %v1503
    %vm1505 = vweird.f32 %v1494
    %vm1506 = vweird.f32 %v1500
    %vm1507 = vmor %vm1505, %vm1506
    %v1508 = vsel %vm1507, %v1500, %v1504
    %v1509 = vand.u32 2147483647, %v1494
    %vm1510 = vcmp.eq.f32.partialorder %v1509, 8.507059e+37
    %v1511 = vand.u32 %v1494, 2147483648
    %v1512 = vor.u32 1.1754944e-38, %v1511
    %v1513 = vsel %vm1510, %v1512, %v1508
    %v1514 = vmul.f32 1.0, %v1513
    %v1515 = vrcp.pop %v1495
    %v1516 = vmul.f32 %v1495, %v1515
    %v1517 = vsub.f32 1.0, %v1516
    %v1518 = vmul.f32 %v1515, %v1517
    %v1519 = vadd.f32 %v1515, %v1518
    %vm1520 = vweird.f32 %v1495
    %vm1521 = vweird.f32 %v1515
    %vm1522 = vmor %vm1520, %vm1521
    %v1523 = vsel %vm1522, %v1515, %v1519
    %v1524 = vand.u32 2147483647, %v1495
    %vm1525 = vcmp.eq.f32.partialorder %v1524, 8.507059e+37
    %v1526 = vand.u32 %v1495, 2147483648
    %v1527 = vor.u32 1.1754944e-38, %v1526
    %v1528 = vsel %vm1525, %v1527, %v1523
    %v1529 = vmul.f32 1.0, %v1528
    %v1530 = vrcp.pop %v1496
    %v1531 = vmul.f32 %v1496, %v1530
    %v1532 = vsub.f32 1.0, %v1531
    %v1533 = vmul.f32 %v1530, %v1532
    %v1534 = vadd.f32 %v1530, %v1533
    %vm1535 = vweird.f32 %v1496
    %vm1536 = vweird.f32 %v1530
    %vm1537 = vmor %vm1535, %vm1536
    %v1538 = vsel %vm1537, %v1530, %v1534
    %v1539 = vand.u32 2147483647, %v1496
    %vm1540 = vcmp.eq.f32.partialorder %v1539, 8.507059e+37
    %v1541 = vand.u32 %v1496, 2147483648
    %v1542 = vor.u32 1.1754944e-38, %v1541
    %v1543 = vsel %vm1540, %v1542, %v1538
    %v1544 = vmul.f32 1.0, %v1543
    %v1545 = vrcp.pop %v1497
    %v1546 = vmul.f32 %v1497, %v1545
    %v1547 = vsub.f32 1.0, %v1546
    %v1548 = vmul.f32 %v1545, %v1547
    %v1549 = vadd.f32 %v1545, %v1548
    %vm1550 = vweird.f32 %v1497
    %vm1551 = vweird.f32 %v1545
    %vm1552 = vmor %vm1550, %vm1551
    %v1553 = vsel %vm1552, %v1545, %v1549
    %v1554 = vand.u32 2147483647, %v1497
    %vm1555 = vcmp.eq.f32.partialorder %v1554, 8.507059e+37
    %v1556 = vand.u32 %v1497, 2147483648
    %v1557 = vor.u32 1.1754944e-38, %v1556
    %v1558 = vsel %vm1555, %v1557, %v1553
    %v1559 = vmul.f32 1.0, %v1558
    %v1560 = vrcp.pop %v1498
    %v1561 = vmul.f32 %v1498, %v1560
    %v1562 = vsub.f32 1.0, %v1561
    %v1563 = vmul.f32 %v1560, %v1562
    %v1564 = vadd.f32 %v1560, %v1563
    %vm1565 = vweird.f32 %v1498
    %vm1566 = vweird.f32 %v1560
    %vm1567 = vmor %vm1565, %vm1566
    %v1568 = vsel %vm1567, %v1560, %v1564
    %v1569 = vand.u32 2147483647, %v1498
    %vm1570 = vcmp.eq.f32.partialorder %v1569, 8.507059e+37
    %v1571 = vand.u32 %v1498, 2147483648
    %v1572 = vor.u32 1.1754944e-38, %v1571
    %v1573 = vsel %vm1570, %v1572, %v1568
    %v1574 = vmul.f32 1.0, %v1573
    %v1575 = vrcp.pop %v1499
    %v1576 = vmul.f32 %v1499, %v1575
    %v1577 = vsub.f32 1.0, %v1576
    %v1578 = vmul.f32 %v1575, %v1577
    %v1579 = vadd.f32 %v1575, %v1578
    %vm1580 = vweird.f32 %v1499
    %vm1581 = vweird.f32 %v1575
    %vm1582 = vmor %vm1580, %vm1581
    %v1583 = vsel %vm1582, %v1575, %v1579
    %v1584 = vand.u32 2147483647, %v1499
    %vm1585 = vcmp.eq.f32.partialorder %v1584, 8.507059e+37
    %v1586 = vand.u32 %v1499, 2147483648
    %v1587 = vor.u32 1.1754944e-38, %v1586
    %v1588 = vsel %vm1585, %v1587, %v1583
    %v1589 = vmul.f32 1.0, %v1588
    %v1590 = vtanh.pop %v1471
    %v1591 = vtanh.pop %v1475
    %v1594 = vrot.slane %v1356, 7
    %v1595 = vrot.slane %v1357, 7
    %v1598 = vmul.f32 %v1529, %v1594
    %v1599 = vmul.f32 %v1574, %v1595
    %v1600 = vmul.f32 %v1514, %v1590
    %v1601 = vmul.f32 %v1559, %v1591
    %v1602 = vadd.f32 %v1598, %v1600
    %v1603 = vadd.f32 %v1599, %v1601
    %v1604 = vtanh.pop %v1602
    %v1605 = vtanh.pop %v1603
    %v1606 = vmul.f32 %v1544, %v1604
    %v1607 = vmul.f32 %v1589, %v1605
    %v1610 = vrot.slane %v1606, 5
    %v1611 = vrot.slane %v1607, 4
    %v1612 = vsel %vm386, %v1611, %v1610
    %1614 = vmatpush.msra.mxu0 %v103
    %1615 = vmatpush.msra.mxu0 %v99
    %1616 = vmatpush.msra.mxu0 %v95
    %1617 = vmatpush.msra.mxu0 %v91
    %1618 = vmatpush.msra.mxu0 %v87
    %1619 = vmatpush.msra.mxu0 %v83
    %1620 = vmatpush.msra.mxu0 %v79
    %1621 = vmatpush.msra.mxu0 %v75
    %1622 = vmatpush.msra.mxu0 %v71
    %1623 = vmatpush.msra.mxu0 %v67
    %1624 = vmatpush.msra.mxu0 %v63
    %1625 = vmatpush.msra.mxu0 %v59
    %1626 = vmatpush.msra.mxu0 %v55
    %1627 = vmatpush.msra.mxu0 %v51
    %1628 = vmatpush.msra.mxu0 %v47
    %1629 = vmatpush.msra.mxu0 %v43
    %1630 = vmatmul.f32.gmra.mxu0 %v1612
    %v1631 = vpop.f32.mrf.mxu0
    %v1632 = vadd.f32 0.0, %v1631
    %1633 = vdwg.mxu0
    %1634 = vmatpush.msra.mxu0 %v104
    %1635 = vmatpush.msra.mxu0 %v100
    %1636 = vmatpush.msra.mxu0 %v96
    %1637 = vmatpush.msra.mxu0 %v92
    %1638 = vmatpush.msra.mxu0 %v88
    %1639 = vmatpush.msra.mxu0 %v84
    %1640 = vmatpush.msra.mxu0 %v80
    %1641 = vmatpush.msra.mxu0 %v76
    %1642 = vmatpush.msra.mxu0 %v72
    %1643 = vmatpush.msra.mxu0 %v68
    %1644 = vmatpush.msra.mxu0 %v64
    %1645 = vmatpush.msra.mxu0 %v60
    %1646 = vmatpush.msra.mxu0 %v56
    %1647 = vmatpush.msra.mxu0 %v52
    %1648 = vmatpush.msra.mxu0 %v48
    %1649 = vmatpush.msra.mxu0 %v44
    %1650 = vmatmul.f32.gmra.mxu0 %v1612
    %v1651 = vpop.f32.mrf.mxu0
    %v1652 = vadd.f32 0.0, %v1651
    %1653 = vdwg.mxu0
    %1654 = vmatpush.msra.mxu0 %v105
    %1655 = vmatpush.msra.mxu0 %v101
    %1656 = vmatpush.msra.mxu0 %v97
    %1657 = vmatpush.msra.mxu0 %v93
    %1658 = vmatpush.msra.mxu0 %v89
    %1659 = vmatpush.msra.mxu0 %v85
    %1660 = vmatpush.msra.mxu0 %v81
    %1661 = vmatpush.msra.mxu0 %v77
    %1662 = vmatpush.msra.mxu0 %v73
    %1663 = vmatpush.msra.mxu0 %v69
    %1664 = vmatpush.msra.mxu0 %v65
    %1665 = vmatpush.msra.mxu0 %v61
    %1666 = vmatpush.msra.mxu0 %v57
    %1667 = vmatpush.msra.mxu0 %v53
    %1668 = vmatpush.msra.mxu0 %v49
    %1669 = vmatpush.msra.mxu0 %v45
    %1670 = vmatmul.f32.gmra.mxu0 %v1612
    %v1671 = vpop.f32.mrf.mxu0
    %v1672 = vadd.f32 0.0, %v1671
    %1673 = vdwg.mxu0
    %1674 = vmatpush.msra.mxu0 %v106
    %1675 = vmatpush.msra.mxu0 %v102
    %1676 = vmatpush.msra.mxu0 %v98
    %1677 = vmatpush.msra.mxu0 %v94
    %1678 = vmatpush.msra.mxu0 %v90
    %1679 = vmatpush.msra.mxu0 %v86
    %1680 = vmatpush.msra.mxu0 %v82
    %1681 = vmatpush.msra.mxu0 %v78
    %1682 = vmatpush.msra.mxu0 %v74
    %1683 = vmatpush.msra.mxu0 %v70
    %1684 = vmatpush.msra.mxu0 %v66
    %1685 = vmatpush.msra.mxu0 %v62
    %1686 = vmatpush.msra.mxu0 %v58
    %1687 = vmatpush.msra.mxu0 %v54
    %1688 = vmatpush.msra.mxu0 %v50
    %1689 = vmatpush.msra.mxu0 %v46
    %1690 = vmatmul.f32.gmra.mxu0 %v1612
    %v1691 = vpop.f32.mrf.mxu0
    %v1692 = vadd.f32 0.0, %v1691
    %1693 = vdwg.mxu0
    %v1698 = vrot.slane %v1632, 2
    %v1699 = vrot.slane %v1652, 2
    %v1700 = vrot.slane %v1672, 2
    %v1701 = vrot.slane %v1692, 2
    %v1702 = vrot.slane %v1632, 3
    %v1703 = vrot.slane %v1652, 3
    %v1704 = vrot.slane %v1672, 3
    %v1705 = vrot.slane %v1692, 3
    %v1714 = vadd.f32 %v145, %v1698
    %v1715 = vadd.f32 %v146, %v1699
    %v1716 = vadd.f32 %v147, %v1700
    %v1717 = vadd.f32 %v148, %v1701
    %v1718 = vadd.f32 %v149, %v1702
    %v1719 = vadd.f32 %v150, %v1703
    %v1720 = vadd.f32 %v151, %v1704
    %v1721 = vadd.f32 %v152, %v1705
    %v1722 = vxor.u32 %v1714, 2147483648
    %v1723 = vxor.u32 %v1715, 2147483648
    %v1724 = vxor.u32 %v1716, 2147483648
    %v1725 = vxor.u32 %v1718, 2147483648
    %v1726 = vxor.u32 %v1719, 2147483648
    %v1727 = vxor.u32 %v1720, 2147483648
    %v1728 = vmul.f32 %v1722, 1.442695
    %v1729 = vpow.pop %v1728
    %v1730 = vmul.f32 %v1723, 1.442695
    %v1731 = vpow.pop %v1730
    %v1732 = vmul.f32 %v1724, 1.442695
    %v1733 = vpow.pop %v1732
    %v1734 = vmul.f32 %v1725, 1.442695
    %v1735 = vpow.pop %v1734
    %v1736 = vmul.f32 %v1726, 1.442695
    %v1737 = vpow.pop %v1736
    %v1738 = vmul.f32 %v1727, 1.442695
    %v1739 = vpow.pop %v1738
    %v1740 = vadd.f32 %v1729, 1.0
    %v1741 = vadd.f32 %v1731, 1.0
    %v1742 = vadd.f32 %v1733, 1.0
    %v1743 = vadd.f32 %v1735, 1.0
    %v1744 = vadd.f32 %v1737, 1.0
    %v1745 = vadd.f32 %v1739, 1.0
    %v1746 = vrcp.pop %v1740
    %v1747 = vmul.f32 %v1740, %v1746
    %v1748 = vsub.f32 1.0, %v1747
    %v1749 = vmul.f32 %v1746, %v1748
    %v1750 = vadd.f32 %v1746, %v1749
    %vm1751 = vweird.f32 %v1740
    %vm1752 = vweird.f32 %v1746
    %vm1753 = vmor %vm1751, %vm1752
    %v1754 = vsel %vm1753, %v1746, %v1750
    %v1755 = vand.u32 2147483647, %v1740
    %vm1756 = vcmp.eq.f32.partialorder %v1755, 8.507059e+37
    %v1757 = vand.u32 %v1740, 2147483648
    %v1758 = vor.u32 1.1754944e-38, %v1757
    %v1759 = vsel %vm1756, %v1758, %v1754
    %v1760 = vmul.f32 1.0, %v1759
    %v1761 = vrcp.pop %v1741
    %v1762 = vmul.f32 %v1741, %v1761
    %v1763 = vsub.f32 1.0, %v1762
    %v1764 = vmul.f32 %v1761, %v1763
    %v1765 = vadd.f32 %v1761, %v1764
    %vm1766 = vweird.f32 %v1741
    %vm1767 = vweird.f32 %v1761
    %vm1768 = vmor %vm1766, %vm1767
    %v1769 = vsel %vm1768, %v1761, %v1765
    %v1770 = vand.u32 2147483647, %v1741
    %vm1771 = vcmp.eq.f32.partialorder %v1770, 8.507059e+37
    %v1772 = vand.u32 %v1741, 2147483648
    %v1773 = vor.u32 1.1754944e-38, %v1772
    %v1774 = vsel %vm1771, %v1773, %v1769
    %v1775 = vmul.f32 1.0, %v1774
    %v1776 = vrcp.pop %v1742
    %v1777 = vmul.f32 %v1742, %v1776
    %v1778 = vsub.f32 1.0, %v1777
    %v1779 = vmul.f32 %v1776, %v1778
    %v1780 = vadd.f32 %v1776, %v1779
    %vm1781 = vweird.f32 %v1742
    %vm1782 = vweird.f32 %v1776
    %vm1783 = vmor %vm1781, %vm1782
    %v1784 = vsel %vm1783, %v1776, %v1780
    %v1785 = vand.u32 2147483647, %v1742
    %vm1786 = vcmp.eq.f32.partialorder %v1785, 8.507059e+37
    %v1787 = vand.u32 %v1742, 2147483648
    %v1788 = vor.u32 1.1754944e-38, %v1787
    %v1789 = vsel %vm1786, %v1788, %v1784
    %v1790 = vmul.f32 1.0, %v1789
    %v1791 = vrcp.pop %v1743
    %v1792 = vmul.f32 %v1743, %v1791
    %v1793 = vsub.f32 1.0, %v1792
    %v1794 = vmul.f32 %v1791, %v1793
    %v1795 = vadd.f32 %v1791, %v1794
    %vm1796 = vweird.f32 %v1743
    %vm1797 = vweird.f32 %v1791
    %vm1798 = vmor %vm1796, %vm1797
    %v1799 = vsel %vm1798, %v1791, %v1795
    %v1800 = vand.u32 2147483647, %v1743
    %vm1801 = vcmp.eq.f32.partialorder %v1800, 8.507059e+37
    %v1802 = vand.u32 %v1743, 2147483648
    %v1803 = vor.u32 1.1754944e-38, %v1802
    %v1804 = vsel %vm1801, %v1803, %v1799
    %v1805 = vmul.f32 1.0, %v1804
    %v1806 = vrcp.pop %v1744
    %v1807 = vmul.f32 %v1744, %v1806
    %v1808 = vsub.f32 1.0, %v1807
    %v1809 = vmul.f32 %v1806, %v1808
    %v1810 = vadd.f32 %v1806, %v1809
    %vm1811 = vweird.f32 %v1744
    %vm1812 = vweird.f32 %v1806
    %vm1813 = vmor %vm1811, %vm1812
    %v1814 = vsel %vm1813, %v1806, %v1810
    %v1815 = vand.u32 2147483647, %v1744
    %vm1816 = vcmp.eq.f32.partialorder %v1815, 8.507059e+37
    %v1817 = vand.u32 %v1744, 2147483648
    %v1818 = vor.u32 1.1754944e-38, %v1817
    %v1819 = vsel %vm1816, %v1818, %v1814
    %v1820 = vmul.f32 1.0, %v1819
    %v1821 = vrcp.pop %v1745
    %v1822 = vmul.f32 %v1745, %v1821
    %v1823 = vsub.f32 1.0, %v1822
    %v1824 = vmul.f32 %v1821, %v1823
    %v1825 = vadd.f32 %v1821, %v1824
    %vm1826 = vweird.f32 %v1745
    %vm1827 = vweird.f32 %v1821
    %vm1828 = vmor %vm1826, %vm1827
    %v1829 = vsel %vm1828, %v1821, %v1825
    %v1830 = vand.u32 2147483647, %v1745
    %vm1831 = vcmp.eq.f32.partialorder %v1830, 8.507059e+37
    %v1832 = vand.u32 %v1745, 2147483648
    %v1833 = vor.u32 1.1754944e-38, %v1832
    %v1834 = vsel %vm1831, %v1833, %v1829
    %v1835 = vmul.f32 1.0, %v1834
    %v1836 = vtanh.pop %v1717
    %v1837 = vtanh.pop %v1721
    %v1840 = vrot.slane %v1602, 7
    %v1841 = vrot.slane %v1603, 7
    %v1844 = vmul.f32 %v1775, %v1840
    %v1845 = vmul.f32 %v1820, %v1841
    %v1846 = vmul.f32 %v1760, %v1836
    %v1847 = vmul.f32 %v1805, %v1837
    %v1848 = vadd.f32 %v1844, %v1846
    %v1849 = vadd.f32 %v1845, %v1847
    %v1850 = vtanh.pop %v1848
    %v1851 = vtanh.pop %v1849
    %v1852 = vmul.f32 %v1790, %v1850
    %v1853 = vmul.f32 %v1835, %v1851
    %v1856 = vrot.slane %v1852, 6
    %v1857 = vrot.slane %v1853, 5
    %v1858 = vsel %vm386, %v1857, %v1856
    %1860 = vmatpush.msra.mxu0 %v103
    %1861 = vmatpush.msra.mxu0 %v99
    %1862 = vmatpush.msra.mxu0 %v95
    %1863 = vmatpush.msra.mxu0 %v91
    %1864 = vmatpush.msra.mxu0 %v87
    %1865 = vmatpush.msra.mxu0 %v83
    %1866 = vmatpush.msra.mxu0 %v79
    %1867 = vmatpush.msra.mxu0 %v75
    %1868 = vmatpush.msra.mxu0 %v71
    %1869 = vmatpush.msra.mxu0 %v67
    %1870 = vmatpush.msra.mxu0 %v63
    %1871 = vmatpush.msra.mxu0 %v59
    %1872 = vmatpush.msra.mxu0 %v55
    %1873 = vmatpush.msra.mxu0 %v51
    %1874 = vmatpush.msra.mxu0 %v47
    %1875 = vmatpush.msra.mxu0 %v43
    %1876 = vmatmul.f32.gmra.mxu0 %v1858
    %v1877 = vpop.f32.mrf.mxu0
    %v1878 = vadd.f32 0.0, %v1877
    %1879 = vdwg.mxu0
    %1880 = vmatpush.msra.mxu0 %v104
    %1881 = vmatpush.msra.mxu0 %v100
    %1882 = vmatpush.msra.mxu0 %v96
    %1883 = vmatpush.msra.mxu0 %v92
    %1884 = vmatpush.msra.mxu0 %v88
    %1885 = vmatpush.msra.mxu0 %v84
    %1886 = vmatpush.msra.mxu0 %v80
    %1887 = vmatpush.msra.mxu0 %v76
    %1888 = vmatpush.msra.mxu0 %v72
    %1889 = vmatpush.msra.mxu0 %v68
    %1890 = vmatpush.msra.mxu0 %v64
    %1891 = vmatpush.msra.mxu0 %v60
    %1892 = vmatpush.msra.mxu0 %v56
    %1893 = vmatpush.msra.mxu0 %v52
    %1894 = vmatpush.msra.mxu0 %v48
    %1895 = vmatpush.msra.mxu0 %v44
    %1896 = vmatmul.f32.gmra.mxu0 %v1858
    %v1897 = vpop.f32.mrf.mxu0
    %v1898 = vadd.f32 0.0, %v1897
    %1899 = vdwg.mxu0
    %1900 = vmatpush.msra.mxu0 %v105
    %1901 = vmatpush.msra.mxu0 %v101
    %1902 = vmatpush.msra.mxu0 %v97
    %1903 = vmatpush.msra.mxu0 %v93
    %1904 = vmatpush.msra.mxu0 %v89
    %1905 = vmatpush.msra.mxu0 %v85
    %1906 = vmatpush.msra.mxu0 %v81
    %1907 = vmatpush.msra.mxu0 %v77
    %1908 = vmatpush.msra.mxu0 %v73
    %1909 = vmatpush.msra.mxu0 %v69
    %1910 = vmatpush.msra.mxu0 %v65
    %1911 = vmatpush.msra.mxu0 %v61
    %1912 = vmatpush.msra.mxu0 %v57
    %1913 = vmatpush.msra.mxu0 %v53
    %1914 = vmatpush.msra.mxu0 %v49
    %1915 = vmatpush.msra.mxu0 %v45
    %1916 = vmatmul.f32.gmra.mxu0 %v1858
    %v1917 = vpop.f32.mrf.mxu0
    %v1918 = vadd.f32 0.0, %v1917
    %1919 = vdwg.mxu0
    %1920 = vmatpush.msra.mxu0 %v106
    %1921 = vmatpush.msra.mxu0 %v102
    %1922 = vmatpush.msra.mxu0 %v98
    %1923 = vmatpush.msra.mxu0 %v94
    %1924 = vmatpush.msra.mxu0 %v90
    %1925 = vmatpush.msra.mxu0 %v86
    %1926 = vmatpush.msra.mxu0 %v82
    %1927 = vmatpush.msra.mxu0 %v78
    %1928 = vmatpush.msra.mxu0 %v74
    %1929 = vmatpush.msra.mxu0 %v70
    %1930 = vmatpush.msra.mxu0 %v66
    %1931 = vmatpush.msra.mxu0 %v62
    %1932 = vmatpush.msra.mxu0 %v58
    %1933 = vmatpush.msra.mxu0 %v54
    %1934 = vmatpush.msra.mxu0 %v50
    %1935 = vmatpush.msra.mxu0 %v46
    %1936 = vmatmul.f32.gmra.mxu0 %v1858
    %v1937 = vpop.f32.mrf.mxu0
    %v1938 = vadd.f32 0.0, %v1937
    %1939 = vdwg.mxu0
    %v1944 = vrot.slane %v1878, 1
    %v1945 = vrot.slane %v1898, 1
    %v1946 = vrot.slane %v1918, 1
    %v1947 = vrot.slane %v1938, 1
    %v1948 = vrot.slane %v1878, 2
    %v1949 = vrot.slane %v1898, 2
    %v1950 = vrot.slane %v1918, 2
    %v1951 = vrot.slane %v1938, 2
    %v1960 = vadd.f32 %v145, %v1944
    %v1961 = vadd.f32 %v146, %v1945
    %v1962 = vadd.f32 %v147, %v1946
    %v1963 = vadd.f32 %v148, %v1947
    %v1964 = vadd.f32 %v149, %v1948
    %v1965 = vadd.f32 %v150, %v1949
    %v1966 = vadd.f32 %v151, %v1950
    %v1967 = vadd.f32 %v152, %v1951
    %v1968 = vxor.u32 %v1960, 2147483648
    %v1969 = vxor.u32 %v1961, 2147483648
    %v1970 = vxor.u32 %v1962, 2147483648
    %v1971 = vxor.u32 %v1964, 2147483648
    %v1972 = vxor.u32 %v1965, 2147483648
    %v1973 = vxor.u32 %v1966, 2147483648
    %v1974 = vmul.f32 %v1968, 1.442695
    %v1975 = vpow.pop %v1974
    %v1976 = vmul.f32 %v1969, 1.442695
    %v1977 = vpow.pop %v1976
    %v1978 = vmul.f32 %v1970, 1.442695
    %v1979 = vpow.pop %v1978
    %v1980 = vmul.f32 %v1971, 1.442695
    %v1981 = vpow.pop %v1980
    %v1982 = vmul.f32 %v1972, 1.442695
    %v1983 = vpow.pop %v1982
    %v1984 = vmul.f32 %v1973, 1.442695
    %v1985 = vpow.pop %v1984
    %v1986 = vadd.f32 %v1975, 1.0
    %v1987 = vadd.f32 %v1977, 1.0
    %v1988 = vadd.f32 %v1979, 1.0
    %v1989 = vadd.f32 %v1981, 1.0
    %v1990 = vadd.f32 %v1983, 1.0
    %v1991 = vadd.f32 %v1985, 1.0
    %v1992 = vrcp.pop %v1986
    %v1993 = vmul.f32 %v1986, %v1992
    %v1994 = vsub.f32 1.0, %v1993
    %v1995 = vmul.f32 %v1992, %v1994
    %v1996 = vadd.f32 %v1992, %v1995
    %vm1997 = vweird.f32 %v1986
    %vm1998 = vweird.f32 %v1992
    %vm1999 = vmor %vm1997, %vm1998
    %v2000 = vsel %vm1999, %v1992, %v1996
    %v2001 = vand.u32 2147483647, %v1986
    %vm2002 = vcmp.eq.f32.partialorder %v2001, 8.507059e+37
    %v2003 = vand.u32 %v1986, 2147483648
    %v2004 = vor.u32 1.1754944e-38, %v2003
    %v2005 = vsel %vm2002, %v2004, %v2000
    %v2006 = vmul.f32 1.0, %v2005
    %v2007 = vrcp.pop %v1987
    %v2008 = vmul.f32 %v1987, %v2007
    %v2009 = vsub.f32 1.0, %v2008
    %v2010 = vmul.f32 %v2007, %v2009
    %v2011 = vadd.f32 %v2007, %v2010
    %vm2012 = vweird.f32 %v1987
    %vm2013 = vweird.f32 %v2007
    %vm2014 = vmor %vm2012, %vm2013
    %v2015 = vsel %vm2014, %v2007, %v2011
    %v2016 = vand.u32 2147483647, %v1987
    %vm2017 = vcmp.eq.f32.partialorder %v2016, 8.507059e+37
    %v2018 = vand.u32 %v1987, 2147483648
    %v2019 = vor.u32 1.1754944e-38, %v2018
    %v2020 = vsel %vm2017, %v2019, %v2015
    %v2021 = vmul.f32 1.0, %v2020
    %v2022 = vrcp.pop %v1988
    %v2023 = vmul.f32 %v1988, %v2022
    %v2024 = vsub.f32 1.0, %v2023
    %v2025 = vmul.f32 %v2022, %v2024
    %v2026 = vadd.f32 %v2022, %v2025
    %vm2027 = vweird.f32 %v1988
    %vm2028 = vweird.f32 %v2022
    %vm2029 = vmor %vm2027, %vm2028
    %v2030 = vsel %vm2029, %v2022, %v2026
    %v2031 = vand.u32 2147483647, %v1988
    %vm2032 = vcmp.eq.f32.partialorder %v2031, 8.507059e+37
    %v2033 = vand.u32 %v1988, 2147483648
    %v2034 = vor.u32 1.1754944e-38, %v2033
    %v2035 = vsel %vm2032, %v2034, %v2030
    %v2036 = vmul.f32 1.0, %v2035
    %v2037 = vrcp.pop %v1989
    %v2038 = vmul.f32 %v1989, %v2037
    %v2039 = vsub.f32 1.0, %v2038
    %v2040 = vmul.f32 %v2037, %v2039
    %v2041 = vadd.f32 %v2037, %v2040
    %vm2042 = vweird.f32 %v1989
    %vm2043 = vweird.f32 %v2037
    %vm2044 = vmor %vm2042, %vm2043
    %v2045 = vsel %vm2044, %v2037, %v2041
    %v2046 = vand.u32 2147483647, %v1989
    %vm2047 = vcmp.eq.f32.partialorder %v2046, 8.507059e+37
    %v2048 = vand.u32 %v1989, 2147483648
    %v2049 = vor.u32 1.1754944e-38, %v2048
    %v2050 = vsel %vm2047, %v2049, %v2045
    %v2051 = vmul.f32 1.0, %v2050
    %v2052 = vrcp.pop %v1990
    %v2053 = vmul.f32 %v1990, %v2052
    %v2054 = vsub.f32 1.0, %v2053
    %v2055 = vmul.f32 %v2052, %v2054
    %v2056 = vadd.f32 %v2052, %v2055
    %vm2057 = vweird.f32 %v1990
    %vm2058 = vweird.f32 %v2052
    %vm2059 = vmor %vm2057, %vm2058
    %v2060 = vsel %vm2059, %v2052, %v2056
    %v2061 = vand.u32 2147483647, %v1990
    %vm2062 = vcmp.eq.f32.partialorder %v2061, 8.507059e+37
    %v2063 = vand.u32 %v1990, 2147483648
    %v2064 = vor.u32 1.1754944e-38, %v2063
    %v2065 = vsel %vm2062, %v2064, %v2060
    %v2066 = vmul.f32 1.0, %v2065
    %v2067 = vrcp.pop %v1991
    %v2068 = vmul.f32 %v1991, %v2067
    %v2069 = vsub.f32 1.0, %v2068
    %v2070 = vmul.f32 %v2067, %v2069
    %v2071 = vadd.f32 %v2067, %v2070
    %vm2072 = vweird.f32 %v1991
    %vm2073 = vweird.f32 %v2067
    %vm2074 = vmor %vm2072, %vm2073
    %v2075 = vsel %vm2074, %v2067, %v2071
    %v2076 = vand.u32 2147483647, %v1991
    %vm2077 = vcmp.eq.f32.partialorder %v2076, 8.507059e+37
    %v2078 = vand.u32 %v1991, 2147483648
    %v2079 = vor.u32 1.1754944e-38, %v2078
    %v2080 = vsel %vm2077, %v2079, %v2075
    %v2081 = vmul.f32 1.0, %v2080
    %v2082 = vtanh.pop %v1963
    %v2083 = vtanh.pop %v1967
    %v2086 = vrot.slane %v1848, 7
    %v2087 = vrot.slane %v1849, 7
    %v2090 = vmul.f32 %v2021, %v2086
    %v2091 = vmul.f32 %v2066, %v2087
    %v2092 = vmul.f32 %v2006, %v2082
    %v2093 = vmul.f32 %v2051, %v2083
    %v2094 = vadd.f32 %v2090, %v2092
    %v2095 = vadd.f32 %v2091, %v2093
    %v2096 = vtanh.pop %v2094
    %v2097 = vtanh.pop %v2095
    %v2098 = vmul.f32 %v2036, %v2096
    %v2099 = vmul.f32 %v2081, %v2097
    %v2100 = vld [vmem:[%s4] sm:$0x1]
    %v2102 = vperm.slane %v2100, 0
    %v2104 = vmul.f32 %v2098, %v2102
    %v2105 = vmul.f32 %v2099, %v2102
    %v2108 = vrot.slane %v2105, 7
    %vm2111 = vcmask 1047559
    %v2112 = vsel %vm2111, %v2104, 0.0
    %2113 = vadd.xlane.f32.xlu0 %v2112
    %v2114 = vpop.xlane.xlu0 %2113
    %vm2115 = vcmask 1040384
    %v2116 = vsel %vm2115, %v2108, 0.0
    %2117 = vadd.xlane.f32.xlu0 %v2116
    %v2118 = vpop.xlane.xlu0 %2117
    %v2119 = vld [vmem:[#allocation2] sm:$0x1]
    %v2121 = vperm.slane %v2119, 0
    %v2123 = vadd.f32 %v2114, %v2121
    %v2124 = vadd.f32 %v2118, %v2121
    %vm2125 = vcmask 7175
    %2126 = vst.msk [vmem:[%s6 - $0x7] sm:$0x80] %vm2125, %v2123
    %vm2127 = vcmask 0
    %2128 = vst.msk [vmem:[%s6 + $0x1] sm:$0x1] %vm2127, %v2124
    // Predicated region
    $region30: #{lstm_model_forward.1} parent=1 // pred_check
      _
    $region31: #{lstm_model_forward.1} parent=1 // pred_check_branch
      %2130 = sbr.rel (0) target = $region33
    $region32: #{lstm_model_forward.1} parent=1 // pred_region
      _
    $region33: #{lstm_model_forward.1} parent=1 // pred_fallthru
      _
    // Predicated region
    $region34: #{lstm_model_forward.1} parent=1 // pred_check
      _
    $region35: #{lstm_model_forward.1} parent=1 // pred_check_branch
      %2132 = sbr.rel (0) target = $region37
    $region36: #{lstm_model_forward.1} parent=1 // pred_region
      _
    $region37: #{lstm_model_forward.1} parent=1 // pred_fallthru
      _
    %2133 = vsyncpa [#allocation4], 1

</llo_original>
